<compile_context>
chip_gen: v7x
topology: tpu7x:2x2x1
jax: 0.10.0
libtpu: 0.0.40
codegen_flags: <defaults>
</compile_context>

<pallas_src>
import numpy as np
import jax
import jax.numpy as jnp
from jax import lax
from jax.experimental import pallas as pl
from jax.experimental.pallas import tpu as pltpu

# ---------------- sizes (small, synthetic) ----------------
N = 128            # number of query points (flattened (..., 3))
V = 64             # mesh vertices
K = 8              # nearest neighbours per point (NeuMesh uses 8)
D = 16             # per-vertex texture-code dim
H = 32             # decoder hidden dim
S = 2              # number of slave primitives


# ---------------- fused kernel: main decode + all slave blends ----------------
def fused_blend_kernel(idx_ref, w_ref, m_ref, aux_ref,
                       w1s_ref, w1a_ref, w2_ref, b2_ref, out_ref):
    k_nn, tm = idx_ref.shape          # (K, TM) -- points on the lane axis
    s_num = m_ref.shape[0]
    nd = 1 + s_num
    v = w1s_ref.shape[1] // nd

    idx = idx_ref[...]                # (K, TM) int32
    w = w_ref[...]                    # (K, TM) f32

    # per-slave normalized weights + paint masks (VPU, f32)
    wk_all = [w]
    paint_list = []
    for i in range(s_num):
        m = m_ref[i]                                            # (K, TM), 0/1
        sw = w * m
        sw = sw / (jnp.sum(sw, axis=0, keepdims=True) + 1e-8)   # slave_weights
        wk_all.append(sw)
        # paint_region = sum(mask[_indices], -1) >= K (all neighbours painted)
        paint_list.append(jnp.sum(m, axis=0, keepdims=True) >= float(k_nn))

    # Shared one-hot scatter: the (V, TM) equality mask is built once per
    # neighbour and reused by the main decode and every slave (only the weights
    # differ).  Accumulate in f32 on the VPU (v5e has no bf16 VALUs); cast to
    # bf16 only at the MXU dot.
    vid = lax.broadcasted_iota(jnp.int32, (v, tm), 0)
    sel = (vid == idx[0:1, :]).astype(jnp.float32)
    scats = [sel * wk[0:1, :] for wk in wk_all]                 # init with k = 0
    for k in range(1, k_nn):                                    # static unroll, K = 8
        sel = (vid == idx[k:k + 1, :]).astype(jnp.float32)
        scats = [sc + sel * wk[k:k + 1, :] for sc, wk in zip(scats, wk_all)]

    # Fused decodes:
    #   layer 1 = block-diag (features @ w1f) over the stacked scat  (bf16 MXU)
    #           + ONE stacked aux matmul (rotations + b1 folded in)  (bf16 MXU)
    #   layer 2 = one block-diag matmul (f32) + one (3*(1+S), TM) sigmoid.
    scat_all = jnp.concatenate([sc.astype(jnp.bfloat16) for sc in scats], axis=0)
    h = (jnp.dot(w1s_ref[...], scat_all, preferred_element_type=jnp.float32)
         + jnp.dot(w1a_ref[...], aux_ref[...], preferred_element_type=jnp.float32))
    h = jnp.maximum(h, 0.0)
    logits = jnp.dot(w2_ref[...], h, preferred_element_type=jnp.float32) + b2_ref[...]
    colors = jax.nn.sigmoid(logits)                             # (3*(1+S), TM) f32

    # blend_color[paint_region] = slave_color (blend_black=False, blur_edge=False)
    blend = colors[0:3, :]
    for i in range(s_num):
        blend = jnp.where(paint_list[i], colors[3 * (i + 1):3 * (i + 2), :], blend)
    out_ref[...] = blend                                        # lane-dense (3, TM)


# ---------------- one-time parameter packing (hoisted out of the call path) ----------------
def pack_decoder_params(main_mlp, slave_mlps, color_features, edit_color_features, rot_s_m):
    """Call ONCE per parameter set.

    * interpolation folded into layer 1:   fw1 = features @ w1f   (V, H)
    * slave rotations folded into weights: w1d' = rot.T @ w1d, w1n' = rot.T @ w1n
      (exact), so every decode consumes the SAME aux operand
    * b1 folded in via a constant-1 aux row
    * 1+S decodes block-diagonalized / stacked so the kernel does 2 matmuls for
      layer 1 and 1 matmul for layer 2
    * layer-1 operands cast to bf16 (single-pass MXU); layer 2 kept f32 (tiny).
    """
    s_num = len(slave_mlps)
    nd = 1 + s_num
    v, h = color_features.shape[0], main_mlp["w1f"].shape[1]
    k = main_mlp["w1s"].shape[0]
    auxc = ((3 + 3 + k + 1 + 7) // 8) * 8          # [dirs|nabla|ds|1] padded to x8

    def wv_T(mlp, rot):
        if rot is None:
            w1d, w1n = mlp["w1d"], mlp["w1n"]
        else:
            w1d, w1n = rot.T @ mlp["w1d"], rot.T @ mlp["w1n"]
        wv = jnp.concatenate([w1d, w1n, mlp["w1s"], mlp["b1"]], axis=0)  # (3+3+K+1, H)
        return jnp.pad(wv, ((0, auxc - wv.shape[0]), (0, 0))).T          # (H, AUXC)

    mlps = [main_mlp] + list(slave_mlps)
    feats = [color_features] + [edit_color_features] * s_num
    rots = [None] + list(rot_s_m)

    w1_scat = jnp.zeros((nd * h, nd * v), jnp.float32)
    w2 = jnp.zeros((nd * 3, nd * h), jnp.float32)
    w1_aux, b2 = [], []
    for d, (mlp, feat, rot) in enumerate(zip(mlps, feats, rots)):
        fw1 = feat @ mlp["w1f"]                                           # (V, H)
        w1_scat = w1_scat.at[d * h:(d + 1) * h, d * v:(d + 1) * v].set(fw1.T)
        w2 = w2.at[d * 3:(d + 1) * 3, d * h:(d + 1) * h].set(mlp["w2"].T)
        w1_aux.append(wv_T(mlp, rot))
        b2.append(mlp["b2"].T)

    return {
        "w1_scat": w1_scat.astype(jnp.bfloat16),                          # (nd*H, nd*V)
        "w1_aux": jnp.concatenate(w1_aux, axis=0).astype(jnp.bfloat16),   # (nd*H, AUXC)
        "w2": w2,                                                         # (nd*3, nd*H) f32
        "b2": jnp.concatenate(b2, axis=0),                                # (nd*3, 1)  f32
    }


# ---------------- per-call wrapper: layout / padding / pallas_call ----------------
def fused_blend_pallas(packed, masks, indices, weights, ds, dirs, nabla):
    n, k_nn = indices.shape
    s_num = masks.shape[0]
    auxc = packed["w1_aux"].shape[1]

    # TM: 128 = full MXU lane width on v5e and a single grid step at this toy
    # size; 256 fills the 256-lane MXU on v6e/v7x at production N (where the
    # grid then has >=2 "parallel" steps so v7x's second TensorCore is used).
    tm = 128 if n <= 128 else 256
    n_pad = -(-n // tm) * tm
    pad = n_pad - n

    # Single shared aux operand [dirs | nabla | ds | 1 | zero-pad]; the slave
    # rotations and b1 are already folded into packed["w1_aux"].
    aux = jnp.concatenate([dirs, nabla, ds, jnp.ones((n, 1), jnp.float32)], axis=-1)
    aux = jnp.pad(aux, ((0, pad), (0, auxc - aux.shape[-1])))

    # Lane-dense (C, N) layouts: N on the lane axis -> unmasked loads and store.
    idxT = jnp.pad(indices.astype(jnp.int32), ((0, pad), (0, 0))).T          # (K, Np)
    wT = jnp.pad(weights, ((0, pad), (0, 0))).T                              # (K, Np)
    mT = jnp.pad(jnp.transpose(masks[:, indices], (0, 2, 1)),
                 ((0, 0), (0, 0), (0, pad)))                                 # (S, K, Np)
    auxT = aux.T.astype(jnp.bfloat16)                                        # (AUXC, Np)

    row2 = lambda i: (0, i)
    row3 = lambda i: (0, 0, i)
    const = lambda i: (0, 0)

    out = pl.pallas_call(
        fused_blend_kernel,
        out_shape=jax.ShapeDtypeStruct((3, n_pad), jnp.float32),
        grid_spec=pl.GridSpec(
            grid=(n_pad // tm,),
            in_specs=[
                pl.BlockSpec((k_nn, tm), row2),               # indices^T
                pl.BlockSpec((k_nn, tm), row2),               # weights^T
                pl.BlockSpec((s_num, k_nn, tm), row3),        # mask[indices]^T, stacked
                pl.BlockSpec((auxc, tm), row2),               # shared [dirs|nabla|ds|1]^T (bf16)
                pl.BlockSpec(packed["w1_scat"].shape, const),  # block-diag prefolded fw1 (bf16)
                pl.BlockSpec(packed["w1_aux"].shape, const),   # stacked rot-folded aux weights (bf16)
                pl.BlockSpec(packed["w2"].shape, const),       # block-diag w2 (f32)
                pl.BlockSpec(packed["b2"].shape, const),       # stacked b2 (f32)
            ],
            out_specs=pl.BlockSpec((3, tm), row2),            # lane-dense (3, Np) output
        ),
        compiler_params=pltpu.CompilerParams(dimension_semantics=("parallel",)),
    )(idxT, wT, mT, auxT,
      packed["w1_scat"], packed["w1_aux"], packed["w2"], packed["b2"])
    return out[:, :n].T                                                      # (N, 3)


# ---------------- geometry glue (forward_with_ds of the main primitive) ----------------
def forward_with_ds(mesh_vertices, xyz):
    """Synthetic NeuMesh 'forward_with_ds': KNN against mesh vertices.
    Returns sdf, nabla, _ds, _indices, _weights."""
    dist = jnp.sqrt(jnp.sum((xyz[:, None, :] - mesh_vertices[None, :, :]) ** 2, -1) + 1e-12)
    neg_top, indices = lax.top_k(-dist, K)   # TODO(synk): top-k KNN has no clean Pallas equivalent; kept in JAX glue
    ds = -neg_top                            # (N, K)
    w = 1.0 / (ds + 1e-6)
    w = w / jnp.sum(w, axis=-1, keepdims=True)
    sdf = jnp.sum(w * ds, axis=-1) - 0.25
    centroid = jnp.sum(w[..., None] * mesh_vertices[indices], axis=-2)
    nabla = xyz - centroid
    nabla = nabla / (jnp.linalg.norm(nabla, axis=-1, keepdims=True) + 1e-8)
    return sdf, nabla, ds, indices.astype(jnp.int32), w


def transform_direction(rot_s_m, dirs):
    return dirs @ rot_s_m.T


def transform_vertices(rot_s_m, t_s_m, xyz):
    # Defined for spec fidelity; its result (slave_xyz) is unused under method='code'.
    return xyz @ rot_s_m.T + t_s_m


# ---------------- full module forward ----------------
def texture_editable_neumesh_forward(mesh_vertices, masks, packed, xyz, view_dirs):
    sdf, nabla, _ds, _indices, _weights = forward_with_ds(mesh_vertices, xyz)
    # _raw_ds of the reference is computed-but-unused -> dropped (pure overhead).
    blend_color = fused_blend_pallas(packed, masks, _indices, _weights, _ds,
                                     view_dirs, nabla)
    return sdf, blend_color


# ---------------- pure-JAX reference (for a sanity check) ----------------
def _decode_ref(indices, w, ds, dirs, nabla, feat, mlp):
    interp = jnp.sum(w[..., None] * feat[indices], axis=-2)
    h = (interp @ mlp["w1f"] + dirs @ mlp["w1d"] + nabla @ mlp["w1n"]
         + ds @ mlp["w1s"] + mlp["b1"])
    h = jnp.maximum(h, 0.0)
    return jax.nn.sigmoid(h @ mlp["w2"] + mlp["b2"])


def reference_forward(params, xyz, view_dirs):
    sdf, nabla, _ds, _indices, _weights = forward_with_ds(params["mesh_vertices"], xyz)
    blend = _decode_ref(_indices, _weights, _ds, view_dirs, nabla,
                        params["color_features"], params["main_mlp"])
    for i in range(len(params["slave_mlps"])):
        mask = params["masks"][i]
        m = mask[_indices]
        sw = _weights * m
        sw = sw / (jnp.sum(sw, axis=-1, keepdims=True) + 1e-8)
        paint = jnp.sum(m, axis=-1, keepdims=True) >= float(K)
        rot = params["rot_s_m"][i]
        sc = _decode_ref(_indices, sw, _ds,
                         transform_direction(rot, view_dirs),
                         transform_direction(rot, nabla),
                         params["edit_color_features"], params["slave_mlps"][i])
        blend = jnp.where(paint, sc, blend)
    return sdf, blend


# ---------------- deterministic parameter init ----------------
def init_mlp(key):
    ks = jax.random.split(key, 5)
    s1 = 1.0 / np.sqrt(D + K + 6)
    s2 = 1.0 / np.sqrt(H)
    return {
        "w1f": s1 * jax.random.normal(ks[0], (D, H), jnp.float32),
        "w1d": s1 * jax.random.normal(ks[1], (3, H), jnp.float32),
        "w1n": s1 * jax.random.normal(ks[2], (3, H), jnp.float32),
        "w1s": s1 * jax.random.normal(ks[3], (K, H), jnp.float32),
        "b1": jnp.zeros((1, H), jnp.float32),
        "w2": s2 * jax.random.normal(ks[4], (H, 3), jnp.float32),
        "b2": jnp.zeros((1, 3), jnp.float32),
    }


def make_rotation_z(theta):
    c, s = np.cos(theta), np.sin(theta)
    return jnp.array([[c, -s, 0.0], [s, c, 0.0], [0.0, 0.0, 1.0]], jnp.float32)


def make_rotation_x(theta):
    c, s = np.cos(theta), np.sin(theta)
    return jnp.array([[1.0, 0.0, 0.0], [0.0, c, -s], [0.0, s, c]], jnp.float32)


if __name__ == "__main__":
    key = jax.random.PRNGKey(0)
    keys = jax.random.split(key, 8)

    mesh_vertices = jax.random.uniform(keys[0], (V, 3), jnp.float32, -1.0, 1.0)
    xyz = jax.random.uniform(keys[1], (N, 3), jnp.float32, -1.0, 1.0)
    view_dirs = jax.random.normal(keys[2], (N, 3), jnp.float32)
    view_dirs = view_dirs / (jnp.linalg.norm(view_dirs, axis=-1, keepdims=True) + 1e-8)

    params = {
        "mesh_vertices": mesh_vertices,
        "color_features": 0.5 * jax.random.normal(keys[3], (V, D), jnp.float32),
        "edit_color_features": 0.5 * jax.random.normal(keys[4], (V, D), jnp.float32),
        "main_mlp": init_mlp(keys[5]),
        "slave_mlps": [init_mlp(keys[6]), init_mlp(keys[7])],
        # spatially coherent paint masks over mesh vertices (bool -> float 0/1)
        "masks": [(mesh_vertices[:, 0] > 0.0).astype(jnp.float32),
                  (mesh_vertices[:, 1] > 0.0).astype(jnp.float32)],
        "rot_s_m": [make_rotation_z(np.pi / 6.0), make_rotation_x(-np.pi / 9.0)],
        "t_s_m": [jnp.array([0.1, -0.2, 0.05], jnp.float32),
                  jnp.array([-0.05, 0.1, 0.2], jnp.float32)],
    }

    # One-time, per-parameter-set packing (hoisted out of the per-call path).
    packed = pack_decoder_params(params["main_mlp"], params["slave_mlps"],
                                 params["color_features"],
                                 params["edit_color_features"],
                                 params["rot_s_m"])
    masks_stacked = jnp.stack(params["masks"])                       # (S, V)

    fwd = jax.jit(texture_editable_neumesh_forward)
    sdf, blend_color = fwd(params["mesh_vertices"], masks_stacked, packed, xyz, view_dirs)
    sdf = jax.block_until_ready(sdf)
    blend_color = jax.block_until_ready(blend_color)

    # sanity check against a pure-JAX f32 reference
    sdf_ref, blend_ref = reference_forward(params, xyz, view_dirs)
    np.testing.assert_allclose(np.asarray(sdf), np.asarray(sdf_ref), atol=1e-3, rtol=0)
    # layer-1 MXU operands are bf16 (f32 accumulation, f32 sigmoid/ReLU/layer-2)
    # -> slightly looser absolute tolerance on the sigmoid colour outputs.
    np.testing.assert_allclose(np.asarray(blend_color), np.asarray(blend_ref),
                               atol=1e-2, rtol=0)

    print("KERNEL_OK")
</pallas_src>

<mosaic_0001>
module attributes {stable_mosaic.version = 11 : i64} {
  func.func @fused_blend_kernel(%arg0: i32, %arg1: memref<8x128xi32, #tpu.memory_space<vmem>>, %arg2: memref<8x128xf32, #tpu.memory_space<vmem>>, %arg3: memref<2x8x128xf32, #tpu.memory_space<vmem>>, %arg4: memref<16x128xbf16, #tpu.memory_space<vmem>>, %arg5: memref<96x192xbf16, #tpu.memory_space<vmem>>, %arg6: memref<96x16xbf16, #tpu.memory_space<vmem>>, %arg7: memref<9x96xf32, #tpu.memory_space<vmem>>, %arg8: memref<9x1xf32, #tpu.memory_space<vmem>>, %arg9: memref<3x128xf32, #tpu.memory_space<vmem>>) attributes {dimension_semantics = [#tpu.dimension_semantics<parallel>], iteration_bounds = array<i64: 1>, scalar_prefetch = 0 : i64, scratch_operands = 0 : i64, tpu.core_type = #tpu.core_type<tc>, window_params = [{transform_indices = @transform_0, window_bounds = array<i64: 8, 128>}, {transform_indices = @transform_1, window_bounds = array<i64: 8, 128>}, {transform_indices = @transform_2, window_bounds = array<i64: 2, 8, 128>}, {transform_indices = @transform_3, window_bounds = array<i64: 16, 128>}, {pipeline_mode = #tpu.pipeline_mode<synchronous>, transform_indices = @transform_4, window_bounds = array<i64: 96, 192>}, {pipeline_mode = #tpu.pipeline_mode<synchronous>, transform_indices = @transform_5, window_bounds = array<i64: 96, 16>}, {pipeline_mode = #tpu.pipeline_mode<synchronous>, transform_indices = @transform_6, window_bounds = array<i64: 9, 96>}, {pipeline_mode = #tpu.pipeline_mode<synchronous>, transform_indices = @transform_7, window_bounds = array<i64: 9, 1>}, {transform_indices = @transform_8, window_bounds = array<i64: 3, 128>}]} {
    %c0 = arith.constant 0 : index
    %c0_0 = arith.constant 0 : index
    %0 = vector.load %arg1[%c0, %c0_0] : memref<8x128xi32, #tpu.memory_space<vmem>>, vector<8x128xi32>
    %c0_1 = arith.constant 0 : index
    %c0_2 = arith.constant 0 : index
    %1 = vector.load %arg2[%c0_1, %c0_2] : memref<8x128xf32, #tpu.memory_space<vmem>>, vector<8x128xf32>
    %c0_3 = arith.constant 0 : index
    %c0_4 = arith.constant 0 : index
    %c0_5 = arith.constant 0 : index
    %2 = vector.load %arg3[%c0_3, %c0_4, %c0_5] : memref<2x8x128xf32, #tpu.memory_space<vmem>>, vector<1x8x128xf32>
    %3 = vector.shape_cast %2 : vector<1x8x128xf32> to vector<8x128xf32>
    %4 = arith.mulf %1, %3 : vector<8x128xf32>
    %cst = arith.constant dense<0.000000e+00> : vector<128xf32>
    %5 = vector.multi_reduction <add>, %4, %cst [0] : vector<8x128xf32> to vector<128xf32>
    %6 = vector.shape_cast %5 : vector<128xf32> to vector<1x128xf32>
    %cst_6 = arith.constant 9.99999993E-9 : f32
    %7 = vector.broadcast %cst_6 : f32 to vector<1x128xf32>
    %8 = arith.addf %6, %7 : vector<1x128xf32>
    %9 = vector.broadcast %8 : vector<1x128xf32> to vector<8x128xf32>
    %10 = arith.divf %4, %9 : vector<8x128xf32>
    %cst_7 = arith.constant dense<0.000000e+00> : vector<128xf32>
    %11 = vector.multi_reduction <add>, %3, %cst_7 [0] : vector<8x128xf32> to vector<128xf32>
    %12 = vector.shape_cast %11 : vector<128xf32> to vector<1x128xf32>
    %cst_8 = arith.constant 8.000000e+00 : f32
    %13 = vector.broadcast %cst_8 : f32 to vector<1x128xf32>
    %14 = arith.cmpf oge, %12, %13 : vector<1x128xf32>
    %c1 = arith.constant 1 : index
    %c0_9 = arith.constant 0 : index
    %c0_10 = arith.constant 0 : index
    %15 = vector.load %arg3[%c1, %c0_9, %c0_10] : memref<2x8x128xf32, #tpu.memory_space<vmem>>, vector<1x8x128xf32>
    %16 = vector.shape_cast %15 : vector<1x8x128xf32> to vector<8x128xf32>
    %17 = arith.mulf %1, %16 : vector<8x128xf32>
    %cst_11 = arith.constant dense<0.000000e+00> : vector<128xf32>
    %18 = vector.multi_reduction <add>, %17, %cst_11 [0] : vector<8x128xf32> to vector<128xf32>
    %19 = vector.shape_cast %18 : vector<128xf32> to vector<1x128xf32>
    %cst_12 = arith.constant 9.99999993E-9 : f32
    %20 = vector.broadcast %cst_12 : f32 to vector<1x128xf32>
    %21 = arith.addf %19, %20 : vector<1x128xf32>
    %22 = vector.broadcast %21 : vector<1x128xf32> to vector<8x128xf32>
    %23 = arith.divf %17, %22 : vector<8x128xf32>
    %cst_13 = arith.constant dense<0.000000e+00> : vector<128xf32>
    %24 = vector.multi_reduction <add>, %16, %cst_13 [0] : vector<8x128xf32> to vector<128xf32>
    %25 = vector.shape_cast %24 : vector<128xf32> to vector<1x128xf32>
    %cst_14 = arith.constant 8.000000e+00 : f32
    %26 = vector.broadcast %cst_14 : f32 to vector<1x128xf32>
    %27 = arith.cmpf oge, %25, %26 : vector<1x128xf32>
    %28 = tpu.iota {dimensions = array<i32: 0>} : vector<64x128xi32>
    %29 = vector.extract_strided_slice %0 {offsets = [0, 0], sizes = [1, 128], strides = [1, 1]} : vector<8x128xi32> to vector<1x128xi32>
    %30 = vector.broadcast %29 : vector<1x128xi32> to vector<64x128xi32>
    %31 = arith.cmpi eq, %28, %30 : vector<64x128xi32>
    %32 = arith.extui %31 : vector<64x128xi1> to vector<64x128xi32>
    %33 = arith.sitofp %32 : vector<64x128xi32> to vector<64x128xf32>
    %34 = vector.extract_strided_slice %1 {offsets = [0, 0], sizes = [1, 128], strides = [1, 1]} : vector<8x128xf32> to vector<1x128xf32>
    %35 = vector.broadcast %34 : vector<1x128xf32> to vector<64x128xf32>
    %36 = arith.mulf %33, %35 : vector<64x128xf32>
    %37 = vector.extract_strided_slice %10 {offsets = [0, 0], sizes = [1, 128], strides = [1, 1]} : vector<8x128xf32> to vector<1x128xf32>
    %38 = vector.broadcast %37 : vector<1x128xf32> to vector<64x128xf32>
    %39 = arith.mulf %33, %38 : vector<64x128xf32>
    %40 = vector.extract_strided_slice %23 {offsets = [0, 0], sizes = [1, 128], strides = [1, 1]} : vector<8x128xf32> to vector<1x128xf32>
    %41 = vector.broadcast %40 : vector<1x128xf32> to vector<64x128xf32>
    %42 = arith.mulf %33, %41 : vector<64x128xf32>
    %43 = vector.extract_strided_slice %0 {offsets = [1, 0], sizes = [1, 128], strides = [1, 1]} : vector<8x128xi32> to vector<1x128xi32>
    %44 = vector.broadcast %43 : vector<1x128xi32> to vector<64x128xi32>
    %45 = arith.cmpi eq, %28, %44 : vector<64x128xi32>
    %46 = arith.extui %45 : vector<64x128xi1> to vector<64x128xi32>
    %47 = arith.sitofp %46 : vector<64x128xi32> to vector<64x128xf32>
    %48 = vector.extract_strided_slice %1 {offsets = [1, 0], sizes = [1, 128], strides = [1, 1]} : vector<8x128xf32> to vector<1x128xf32>
    %49 = vector.broadcast %48 : vector<1x128xf32> to vector<64x128xf32>
    %50 = arith.mulf %47, %49 : vector<64x128xf32>
    %51 = arith.addf %36, %50 : vector<64x128xf32>
    %52 = vector.extract_strided_slice %10 {offsets = [1, 0], sizes = [1, 128], strides = [1, 1]} : vector<8x128xf32> to vector<1x128xf32>
    %53 = vector.broadcast %52 : vector<1x128xf32> to vector<64x128xf32>
    %54 = arith.mulf %47, %53 : vector<64x128xf32>
    %55 = arith.addf %39, %54 : vector<64x128xf32>
    %56 = vector.extract_strided_slice %23 {offsets = [1, 0], sizes = [1, 128], strides = [1, 1]} : vector<8x128xf32> to vector<1x128xf32>
    %57 = vector.broadcast %56 : vector<1x128xf32> to vector<64x128xf32>
    %58 = arith.mulf %47, %57 : vector<64x128xf32>
    %59 = arith.addf %42, %58 : vector<64x128xf32>
    %60 = vector.extract_strided_slice %0 {offsets = [2, 0], sizes = [1, 128], strides = [1, 1]} : vector<8x128xi32> to vector<1x128xi32>
    %61 = vector.broadcast %60 : vector<1x128xi32> to vector<64x128xi32>
    %62 = arith.cmpi eq, %28, %61 : vector<64x128xi32>
    %63 = arith.extui %62 : vector<64x128xi1> to vector<64x128xi32>
    %64 = arith.sitofp %63 : vector<64x128xi32> to vector<64x128xf32>
    %65 = vector.extract_strided_slice %1 {offsets = [2, 0], sizes = [1, 128], strides = [1, 1]} : vector<8x128xf32> to vector<1x128xf32>
    %66 = vector.broadcast %65 : vector<1x128xf32> to vector<64x128xf32>
    %67 = arith.mulf %64, %66 : vector<64x128xf32>
    %68 = arith.addf %51, %67 : vector<64x128xf32>
    %69 = vector.extract_strided_slice %10 {offsets = [2, 0], sizes = [1, 128], strides = [1, 1]} : vector<8x128xf32> to vector<1x128xf32>
    %70 = vector.broadcast %69 : vector<1x128xf32> to vector<64x128xf32>
    %71 = arith.mulf %64, %70 : vector<64x128xf32>
    %72 = arith.addf %55, %71 : vector<64x128xf32>
    %73 = vector.extract_strided_slice %23 {offsets = [2, 0], sizes = [1, 128], strides = [1, 1]} : vector<8x128xf32> to vector<1x128xf32>
    %74 = vector.broadcast %73 : vector<1x128xf32> to vector<64x128xf32>
    %75 = arith.mulf %64, %74 : vector<64x128xf32>
    %76 = arith.addf %59, %75 : vector<64x128xf32>
    %77 = vector.extract_strided_slice %0 {offsets = [3, 0], sizes = [1, 128], strides = [1, 1]} : vector<8x128xi32> to vector<1x128xi32>
    %78 = vector.broadcast %77 : vector<1x128xi32> to vector<64x128xi32>
    %79 = arith.cmpi eq, %28, %78 : vector<64x128xi32>
    %80 = arith.extui %79 : vector<64x128xi1> to vector<64x128xi32>
    %81 = arith.sitofp %80 : vector<64x128xi32> to vector<64x128xf32>
    %82 = vector.extract_strided_slice %1 {offsets = [3, 0], sizes = [1, 128], strides = [1, 1]} : vector<8x128xf32> to vector<1x128xf32>
    %83 = vector.broadcast %82 : vector<1x128xf32> to vector<64x128xf32>
    %84 = arith.mulf %81, %83 : vector<64x128xf32>
    %85 = arith.addf %68, %84 : vector<64x128xf32>
    %86 = vector.extract_strided_slice %10 {offsets = [3, 0], sizes = [1, 128], strides = [1, 1]} : vector<8x128xf32> to vector<1x128xf32>
    %87 = vector.broadcast %86 : vector<1x128xf32> to vector<64x128xf32>
    %88 = arith.mulf %81, %87 : vector<64x128xf32>
    %89 = arith.addf %72, %88 : vector<64x128xf32>
    %90 = vector.extract_strided_slice %23 {offsets = [3, 0], sizes = [1, 128], strides = [1, 1]} : vector<8x128xf32> to vector<1x128xf32>
    %91 = vector.broadcast %90 : vector<1x128xf32> to vector<64x128xf32>
    %92 = arith.mulf %81, %91 : vector<64x128xf32>
    %93 = arith.addf %76, %92 : vector<64x128xf32>
    %94 = vector.extract_strided_slice %0 {offsets = [4, 0], sizes = [1, 128], strides = [1, 1]} : vector<8x128xi32> to vector<1x128xi32>
    %95 = vector.broadcast %94 : vector<1x128xi32> to vector<64x128xi32>
    %96 = arith.cmpi eq, %28, %95 : vector<64x128xi32>
    %97 = arith.extui %96 : vector<64x128xi1> to vector<64x128xi32>
    %98 = arith.sitofp %97 : vector<64x128xi32> to vector<64x128xf32>
    %99 = vector.extract_strided_slice %1 {offsets = [4, 0], sizes = [1, 128], strides = [1, 1]} : vector<8x128xf32> to vector<1x128xf32>
    %100 = vector.broadcast %99 : vector<1x128xf32> to vector<64x128xf32>
    %101 = arith.mulf %98, %100 : vector<64x128xf32>
    %102 = arith.addf %85, %101 : vector<64x128xf32>
    %103 = vector.extract_strided_slice %10 {offsets = [4, 0], sizes = [1, 128], strides = [1, 1]} : vector<8x128xf32> to vector<1x128xf32>
    %104 = vector.broadcast %103 : vector<1x128xf32> to vector<64x128xf32>
    %105 = arith.mulf %98, %104 : vector<64x128xf32>
    %106 = arith.addf %89, %105 : vector<64x128xf32>
    %107 = vector.extract_strided_slice %23 {offsets = [4, 0], sizes = [1, 128], strides = [1, 1]} : vector<8x128xf32> to vector<1x128xf32>
    %108 = vector.broadcast %107 : vector<1x128xf32> to vector<64x128xf32>
    %109 = arith.mulf %98, %108 : vector<64x128xf32>
    %110 = arith.addf %93, %109 : vector<64x128xf32>
    %111 = vector.extract_strided_slice %0 {offsets = [5, 0], sizes = [1, 128], strides = [1, 1]} : vector<8x128xi32> to vector<1x128xi32>
    %112 = vector.broadcast %111 : vector<1x128xi32> to vector<64x128xi32>
    %113 = arith.cmpi eq, %28, %112 : vector<64x128xi32>
    %114 = arith.extui %113 : vector<64x128xi1> to vector<64x128xi32>
    %115 = arith.sitofp %114 : vector<64x128xi32> to vector<64x128xf32>
    %116 = vector.extract_strided_slice %1 {offsets = [5, 0], sizes = [1, 128], strides = [1, 1]} : vector<8x128xf32> to vector<1x128xf32>
    %117 = vector.broadcast %116 : vector<1x128xf32> to vector<64x128xf32>
    %118 = arith.mulf %115, %117 : vector<64x128xf32>
    %119 = arith.addf %102, %118 : vector<64x128xf32>
    %120 = vector.extract_strided_slice %10 {offsets = [5, 0], sizes = [1, 128], strides = [1, 1]} : vector<8x128xf32> to vector<1x128xf32>
    %121 = vector.broadcast %120 : vector<1x128xf32> to vector<64x128xf32>
    %122 = arith.mulf %115, %121 : vector<64x128xf32>
    %123 = arith.addf %106, %122 : vector<64x128xf32>
    %124 = vector.extract_strided_slice %23 {offsets = [5, 0], sizes = [1, 128], strides = [1, 1]} : vector<8x128xf32> to vector<1x128xf32>
    %125 = vector.broadcast %124 : vector<1x128xf32> to vector<64x128xf32>
    %126 = arith.mulf %115, %125 : vector<64x128xf32>
    %127 = arith.addf %110, %126 : vector<64x128xf32>
    %128 = vector.extract_strided_slice %0 {offsets = [6, 0], sizes = [1, 128], strides = [1, 1]} : vector<8x128xi32> to vector<1x128xi32>
    %129 = vector.broadcast %128 : vector<1x128xi32> to vector<64x128xi32>
    %130 = arith.cmpi eq, %28, %129 : vector<64x128xi32>
    %131 = arith.extui %130 : vector<64x128xi1> to vector<64x128xi32>
    %132 = arith.sitofp %131 : vector<64x128xi32> to vector<64x128xf32>
    %133 = vector.extract_strided_slice %1 {offsets = [6, 0], sizes = [1, 128], strides = [1, 1]} : vector<8x128xf32> to vector<1x128xf32>
    %134 = vector.broadcast %133 : vector<1x128xf32> to vector<64x128xf32>
    %135 = arith.mulf %132, %134 : vector<64x128xf32>
    %136 = arith.addf %119, %135 : vector<64x128xf32>
    %137 = vector.extract_strided_slice %10 {offsets = [6, 0], sizes = [1, 128], strides = [1, 1]} : vector<8x128xf32> to vector<1x128xf32>
    %138 = vector.broadcast %137 : vector<1x128xf32> to vector<64x128xf32>
    %139 = arith.mulf %132, %138 : vector<64x128xf32>
    %140 = arith.addf %123, %139 : vector<64x128xf32>
    %141 = vector.extract_strided_slice %23 {offsets = [6, 0], sizes = [1, 128], strides = [1, 1]} : vector<8x128xf32> to vector<1x128xf32>
    %142 = vector.broadcast %141 : vector<1x128xf32> to vector<64x128xf32>
    %143 = arith.mulf %132, %142 : vector<64x128xf32>
    %144 = arith.addf %127, %143 : vector<64x128xf32>
    %145 = vector.extract_strided_slice %0 {offsets = [7, 0], sizes = [1, 128], strides = [1, 1]} : vector<8x128xi32> to vector<1x128xi32>
    %146 = vector.broadcast %145 : vector<1x128xi32> to vector<64x128xi32>
    %147 = arith.cmpi eq, %28, %146 : vector<64x128xi32>
    %148 = arith.extui %147 : vector<64x128xi1> to vector<64x128xi32>
    %149 = arith.sitofp %148 : vector<64x128xi32> to vector<64x128xf32>
    %150 = vector.extract_strided_slice %1 {offsets = [7, 0], sizes = [1, 128], strides = [1, 1]} : vector<8x128xf32> to vector<1x128xf32>
    %151 = vector.broadcast %150 : vector<1x128xf32> to vector<64x128xf32>
    %152 = arith.mulf %149, %151 : vector<64x128xf32>
    %153 = arith.addf %136, %152 : vector<64x128xf32>
    %154 = vector.extract_strided_slice %10 {offsets = [7, 0], sizes = [1, 128], strides = [1, 1]} : vector<8x128xf32> to vector<1x128xf32>
    %155 = vector.broadcast %154 : vector<1x128xf32> to vector<64x128xf32>
    %156 = arith.mulf %149, %155 : vector<64x128xf32>
    %157 = arith.addf %140, %156 : vector<64x128xf32>
    %158 = vector.extract_strided_slice %23 {offsets = [7, 0], sizes = [1, 128], strides = [1, 1]} : vector<8x128xf32> to vector<1x128xf32>
    %159 = vector.broadcast %158 : vector<1x128xf32> to vector<64x128xf32>
    %160 = arith.mulf %149, %159 : vector<64x128xf32>
    %161 = arith.addf %144, %160 : vector<64x128xf32>
    %162 = arith.truncf %153 : vector<64x128xf32> to vector<64x128xbf16>
    %163 = arith.truncf %157 : vector<64x128xf32> to vector<64x128xbf16>
    %164 = arith.truncf %161 : vector<64x128xf32> to vector<64x128xbf16>
    %165 = tpu.concatenate %162, %163, %164 in 0 : vector<64x128xbf16>, vector<64x128xbf16>, vector<64x128xbf16> -> vector<192x128xbf16>
    %c0_15 = arith.constant 0 : index
    %c0_16 = arith.constant 0 : index
    %166 = vector.load %arg5[%c0_15, %c0_16] : memref<96x192xbf16, #tpu.memory_space<vmem>>, vector<96x192xbf16>
    %cst_17 = arith.constant dense<0.000000e+00> : vector<96x128xf32>
    %167 = tpu.matmul %166, %165, %cst_17 {dimension_numbers = #tpu.dot_dimension_numbers<[1], [0], [0], [1], [0, 0, 1, 1], [], []>} : vector<96x192xbf16>, vector<192x128xbf16>, vector<96x128xf32> -> vector<96x128xf32>
    %c0_18 = arith.constant 0 : index
    %c0_19 = arith.constant 0 : index
    %168 = vector.load %arg6[%c0_18, %c0_19] : memref<96x16xbf16, #tpu.memory_space<vmem>>, vector<96x16xbf16>
    %c0_20 = arith.constant 0 : index
    %c0_21 = arith.constant 0 : index
    %169 = vector.load %arg4[%c0_20, %c0_21] : memref<16x128xbf16, #tpu.memory_space<vmem>>, vector<16x128xbf16>
    %cst_22 = arith.constant dense<0.000000e+00> : vector<96x128xf32>
    %170 = tpu.matmul %168, %169, %cst_22 {dimension_numbers = #tpu.dot_dimension_numbers<[1], [0], [0], [1], [0, 0, 1, 1], [], []>} : vector<96x16xbf16>, vector<16x128xbf16>, vector<96x128xf32> -> vector<96x128xf32>
    %171 = arith.addf %167, %170 : vector<96x128xf32>
    %cst_23 = arith.constant 0.000000e+00 : f32
    %172 = vector.broadcast %cst_23 : f32 to vector<96x128xf32>
    %173 = arith.maximumf %171, %172 : vector<96x128xf32>
    %c0_24 = arith.constant 0 : index
    %c0_25 = arith.constant 0 : index
    %174 = vector.load %arg7[%c0_24, %c0_25] : memref<9x96xf32, #tpu.memory_space<vmem>>, vector<9x96xf32>
    %cst_26 = arith.constant dense<0.000000e+00> : vector<9x128xf32>
    %175 = tpu.matmul %174, %173, %cst_26 {dimension_numbers = #tpu.dot_dimension_numbers<[1], [0], [0], [1], [0, 0, 1, 1], [], []>} : vector<9x96xf32>, vector<96x128xf32>, vector<9x128xf32> -> vector<9x128xf32>
    %c0_27 = arith.constant 0 : index
    %c0_28 = arith.constant 0 : index
    %176 = vector.load %arg8[%c0_27, %c0_28] : memref<9x1xf32, #tpu.memory_space<vmem>>, vector<9x1xf32>
    %177 = vector.broadcast %176 : vector<9x1xf32> to vector<9x128xf32>
    %178 = arith.addf %175, %177 : vector<9x128xf32>
    %179 = arith.negf %178 : vector<9x128xf32>
    %180 = math.exp %179 : vector<9x128xf32>
    %cst_29 = arith.constant 1.000000e+00 : f32
    %181 = vector.broadcast %cst_29 : f32 to vector<9x128xf32>
    %182 = arith.addf %181, %180 : vector<9x128xf32>
    %183 = arith.divf %181, %182 : vector<9x128xf32>
    %184 = vector.extract_strided_slice %183 {offsets = [0, 0], sizes = [3, 128], strides = [1, 1]} : vector<9x128xf32> to vector<3x128xf32>
    %185 = vector.extract_strided_slice %183 {offsets = [3, 0], sizes = [3, 128], strides = [1, 1]} : vector<9x128xf32> to vector<3x128xf32>
    %186 = vector.shape_cast %14 : vector<1x128xi1> to vector<1x128xi1>
    %187 = vector.broadcast %186 : vector<1x128xi1> to vector<3x128xi1>
    %188 = arith.select %187, %185, %184 : vector<3x128xi1>, vector<3x128xf32>
    %189 = vector.extract_strided_slice %183 {offsets = [6, 0], sizes = [3, 128], strides = [1, 1]} : vector<9x128xf32> to vector<3x128xf32>
    %190 = vector.shape_cast %27 : vector<1x128xi1> to vector<1x128xi1>
    %191 = vector.broadcast %190 : vector<1x128xi1> to vector<3x128xi1>
    %192 = arith.select %191, %189, %188 : vector<3x128xi1>, vector<3x128xf32>
    %c0_30 = arith.constant 0 : index
    %c0_31 = arith.constant 0 : index
    %193 = vector.load %arg9[%c0_30, %c0_31] : memref<3x128xf32, #tpu.memory_space<vmem>>, vector<3x128xf32>
    tpu.vector_store %arg9[%c0_30, %c0_31], %192 {strides = array<i32>} : memref<3x128xf32, #tpu.memory_space<vmem>>, vector<3x128xf32>,
    return
  }
  func.func @transform_0(%arg0: i32) -> (i32, i32) {
    %c0_i32 = arith.constant 0 : i32
    %c0_i32_0 = arith.constant 0 : i32
    return %c0_i32, %arg0 : i32, i32
  }
  func.func @transform_1(%arg0: i32) -> (i32, i32) {
    %c0_i32 = arith.constant 0 : i32
    %c0_i32_0 = arith.constant 0 : i32
    return %c0_i32, %arg0 : i32, i32
  }
  func.func @transform_2(%arg0: i32) -> (i32, i32, i32) {
    %c0_i32 = arith.constant 0 : i32
    %c0_i32_0 = arith.constant 0 : i32
    %c0_i32_1 = arith.constant 0 : i32
    return %c0_i32, %c0_i32_0, %arg0 : i32, i32, i32
  }
  func.func @transform_3(%arg0: i32) -> (i32, i32) {
    %c0_i32 = arith.constant 0 : i32
    %c0_i32_0 = arith.constant 0 : i32
    return %c0_i32, %arg0 : i32, i32
  }
  func.func @transform_4(%arg0: i32) -> (i32, i32) {
    %c0_i32 = arith.constant 0 : i32
    %c0_i32_0 = arith.constant 0 : i32
    %c0_i32_1 = arith.constant 0 : i32
    return %c0_i32, %c0_i32_0 : i32, i32
  }
  func.func @transform_5(%arg0: i32) -> (i32, i32) {
    %c0_i32 = arith.constant 0 : i32
    %c0_i32_0 = arith.constant 0 : i32
    %c0_i32_1 = arith.constant 0 : i32
    return %c0_i32, %c0_i32_0 : i32, i32
  }
  func.func @transform_6(%arg0: i32) -> (i32, i32) {
    %c0_i32 = arith.constant 0 : i32
    %c0_i32_0 = arith.constant 0 : i32
    %c0_i32_1 = arith.constant 0 : i32
    return %c0_i32, %c0_i32_0 : i32, i32
  }
  func.func @transform_7(%arg0: i32) -> (i32, i32) {
    %c0_i32 = arith.constant 0 : i32
    %c0_i32_0 = arith.constant 0 : i32
    %c0_i32_1 = arith.constant 0 : i32
    return %c0_i32, %c0_i32_0 : i32, i32
  }
  func.func @transform_8(%arg0: i32) -> (i32, i32) {
    %c0_i32 = arith.constant 0 : i32
    %c0_i32_0 = arith.constant 0 : i32
    return %c0_i32, %arg0 : i32, i32
  }
}

</mosaic_0001>

<llo_original>
// kernel: texture_editable_neumesh_forward.1
$region0: #{texture_editable_neumesh_forward.1}
  #allocation0 [shape = 'u32[]', space=smem, size = 0x4, offset = 0x4, fixed_abs, tag = 'smem constant byte address 0x4 - core index']
  #allocation1 [shape = 'u32[144,128]{1,0:T(1,128)}', space=vmem, size = 0x12000, scoped, tag = 'internal scratch']
  %s0 = inlined_call_operand.vmem [shape: s32[8,128], index: 0, kind: input, shape index: {}]
  %s1 = inlined_call_operand.vmem [shape: f32[8,128], index: 1, kind: input, shape index: {}]
  %s2 = inlined_call_operand.vmem [shape: f32[2,8,128], index: 2, kind: input, shape index: {}]
  %s3 = inlined_call_operand.vmem [shape: bf16[16,128], index: 3, kind: input, shape index: {}]
  %s4 = inlined_call_operand.vmem [shape: bf16[96,192], index: 4, kind: input, shape index: {}]
  %s5 = inlined_call_operand.vmem [shape: bf16[96,16], index: 5, kind: input, shape index: {}]
  %s6 = inlined_call_operand.vmem [shape: f32[9,96], index: 6, kind: input, shape index: {}]
  %s7 = inlined_call_operand.vmem [shape: f32[9,1], index: 7, kind: input, shape index: {}]
  %s8 = inlined_call_operand.hbm [shape: f32[3,128], index: 8, kind: output, shape index: {}]
  %s9 = sld [smem:[#allocation0]]
  $region42: #{texture_editable_neumesh_forward.1} parent=0
    _
  %s11 = ssub.s32 1, %s9
  %s12 = scalar_select 0, %s11, %s9
  $region1: #{texture_editable_neumesh_forward.1} parent=0
    #allocation2 [shape = 'u8[2048]{0}', space=vmem, size = 0x800, scoped, tag = 'output window, operand 0, single buffered']
    #allocation3 [shape = 's32[1]{0}', space=sflag, size = 0x4, scoped, tag = 'scoped memory for texture_editable_neumesh_forward.1']
    %13 = vsyncpa [#allocation3], 0
    // Predicated region
    $region2: #{texture_editable_neumesh_forward.1} parent=1 // pred_check
      _
    $region3: #{texture_editable_neumesh_forward.1} parent=1 // pred_check_branch
      %15 = sbr.rel (0) target = $region5
    $region4: #{texture_editable_neumesh_forward.1} parent=1 // pred_region
      _
    $region5: #{texture_editable_neumesh_forward.1} parent=1 // pred_fallthru
      _
    // Predicated region
    $region6: #{texture_editable_neumesh_forward.1} parent=1 // pred_check
      _
    $region7: #{texture_editable_neumesh_forward.1} parent=1 // pred_check_branch
      %17 = sbr.rel (0) target = $region9
    $region8: #{texture_editable_neumesh_forward.1} parent=1 // pred_region
      _
    $region9: #{texture_editable_neumesh_forward.1} parent=1 // pred_fallthru
      _
    // Predicated region
    $region10: #{texture_editable_neumesh_forward.1} parent=1 // pred_check
      _
    $region11: #{texture_editable_neumesh_forward.1} parent=1 // pred_check_branch
      %19 = sbr.rel (0) target = $region13
    $region12: #{texture_editable_neumesh_forward.1} parent=1 // pred_region
      _
    $region13: #{texture_editable_neumesh_forward.1} parent=1 // pred_fallthru
      _
    // Predicated region
    $region14: #{texture_editable_neumesh_forward.1} parent=1 // pred_check
      _
    $region15: #{texture_editable_neumesh_forward.1} parent=1 // pred_check_branch
      %21 = sbr.rel (0) target = $region17
    $region16: #{texture_editable_neumesh_forward.1} parent=1 // pred_region
      _
    $region17: #{texture_editable_neumesh_forward.1} parent=1 // pred_fallthru
      _
    // Predicated region
    $region18: #{texture_editable_neumesh_forward.1} parent=1 // pred_check
      _
    $region19: #{texture_editable_neumesh_forward.1} parent=1 // pred_check_branch
      %23 = sbr.rel (0) target = $region21
    $region20: #{texture_editable_neumesh_forward.1} parent=1 // pred_region
      _
    $region21: #{texture_editable_neumesh_forward.1} parent=1 // pred_fallthru
      _
    // Predicated region
    $region22: #{texture_editable_neumesh_forward.1} parent=1 // pred_check
      _
    $region23: #{texture_editable_neumesh_forward.1} parent=1 // pred_check_branch
      %25 = sbr.rel (0) target = $region25
    $region24: #{texture_editable_neumesh_forward.1} parent=1 // pred_region
      _
    $region25: #{texture_editable_neumesh_forward.1} parent=1 // pred_fallthru
      _
    // Predicated region
    $region26: #{texture_editable_neumesh_forward.1} parent=1 // pred_check
      _
    $region27: #{texture_editable_neumesh_forward.1} parent=1 // pred_check_branch
      %27 = sbr.rel (0) target = $region29
    $region28: #{texture_editable_neumesh_forward.1} parent=1 // pred_region
      _
    $region29: #{texture_editable_neumesh_forward.1} parent=1 // pred_fallthru
      _
    // Predicated region
    $region30: #{texture_editable_neumesh_forward.1} parent=1 // pred_check
      _
    $region31: #{texture_editable_neumesh_forward.1} parent=1 // pred_check_branch
      %29 = sbr.rel (0) target = $region33
    $region32: #{texture_editable_neumesh_forward.1} parent=1 // pred_region
      _
    $region33: #{texture_editable_neumesh_forward.1} parent=1 // pred_fallthru
      _
    %v31 = vld [vmem:[%s0] sm:$0xff]
    %v32 = vld [vmem:[%s1] sm:$0xff]
    %v33 = vld [vmem:[%s2] sm:$0xff]
    %v34 = vmul.f32 %v32, %v33
    %v35 = vrot.slane %v34, 4
    %v36 = vadd.f32 %v34, %v35
    %v37 = vrot.slane %v36, 2
    %v38 = vadd.f32 %v36, %v37
    %v39 = vrot.slane %v38, 1
    %v40 = vadd.f32 %v38, %v39
    %v41 = vadd.f32 %v40, 1e-08
    %v42 = vrcp.pop %v41
    %v43 = vmul.f32 %v34, %v42
    %v44 = vrot.slane %v33, 4
    %v45 = vadd.f32 %v33, %v44
    %v46 = vrot.slane %v45, 2
    %v47 = vadd.f32 %v45, %v46
    %v48 = vrot.slane %v47, 1
    %v49 = vadd.f32 %v47, %v48
    %vm50 = vcmp.ge.f32.partialorder %v49, 8.0
    %s51 = scalar_lea.vmem %s2, 8
    %v52 = vld [vmem:[%s51] sm:$0xff]
    %v53 = vmul.f32 %v32, %v52
    %v54 = vrot.slane %v53, 4
    %v55 = vadd.f32 %v53, %v54
    %v56 = vrot.slane %v55, 2
    %v57 = vadd.f32 %v55, %v56
    %v58 = vrot.slane %v57, 1
    %v59 = vadd.f32 %v57, %v58
    %v60 = vadd.f32 %v59, 1e-08
    %v61 = vrcp.pop %v60
    %v62 = vmul.f32 %v53, %v61
    %v63 = vrot.slane %v52, 4
    %v64 = vadd.f32 %v52, %v63
    %v65 = vrot.slane %v64, 2
    %v66 = vadd.f32 %v64, %v65
    %v67 = vrot.slane %v66, 1
    %v68 = vadd.f32 %v66, %v67
    %vm69 = vcmp.ge.f32.partialorder %v68, 8.0
    %v70 = vlaneseq
    %v71 = vshrl.u32 %v70, 7
    %v72 = vadd.s32 %v71, 8
    %v73 = vadd.s32 %v71, 16
    %v74 = vadd.s32 %v71, 24
    %v75 = vadd.s32 %v71, 32
    %v76 = vadd.s32 %v71, 40
    %v77 = vadd.s32 %v71, 48
    %v78 = vadd.s32 %v71, 56
    %v79 = vlaneseq
    %v80 = vshrl.u32 %v79, 7
    %v81 = vsub.s32 0, %v80
    %v82 = vrot.slane %v31, %v81
    %vm83 = vcmp.eq.s32.totalorder %v71, %v82
    %vm84 = vcmp.eq.s32.totalorder %v72, %v82
    %vm85 = vcmp.eq.s32.totalorder %v73, %v82
    %vm86 = vcmp.eq.s32.totalorder %v74, %v82
    %vm87 = vcmp.eq.s32.totalorder %v75, %v82
    %vm88 = vcmp.eq.s32.totalorder %v76, %v82
    %vm89 = vcmp.eq.s32.totalorder %v77, %v82
    %vm90 = vcmp.eq.s32.totalorder %v78, %v82
    %v91 = vsel %vm83, 1, 0
    %v92 = vsel %vm84, 1, 0
    %v93 = vsel %vm85, 1, 0
    %v94 = vsel %vm86, 1, 0
    %v95 = vsel %vm87, 1, 0
    %v96 = vsel %vm88, 1, 0
    %v97 = vsel %vm89, 1, 0
    %v98 = vsel %vm90, 1, 0
    %v99 = vcvt.s32.f32 %v91
    %v100 = vcvt.s32.f32 %v92
    %v101 = vcvt.s32.f32 %v93
    %v102 = vcvt.s32.f32 %v94
    %v103 = vcvt.s32.f32 %v95
    %v104 = vcvt.s32.f32 %v96
    %v105 = vcvt.s32.f32 %v97
    %v106 = vcvt.s32.f32 %v98
    %v107 = vlaneseq
    %v108 = vshrl.u32 %v107, 7
    %v109 = vsub.s32 0, %v108
    %v110 = vrot.slane %v32, %v109
    %v111 = vmul.f32 %v99, %v110
    %v112 = vmul.f32 %v100, %v110
    %v113 = vmul.f32 %v101, %v110
    %v114 = vmul.f32 %v102, %v110
    %v115 = vmul.f32 %v103, %v110
    %v116 = vmul.f32 %v104, %v110
    %v117 = vmul.f32 %v105, %v110
    %v118 = vmul.f32 %v106, %v110
    %v119 = vlaneseq
    %v120 = vshrl.u32 %v119, 7
    %v121 = vsub.s32 0, %v120
    %v122 = vrot.slane %v43, %v121
    %v123 = vmul.f32 %v99, %v122
    %v124 = vmul.f32 %v100, %v122
    %v125 = vmul.f32 %v101, %v122
    %v126 = vmul.f32 %v102, %v122
    %v127 = vmul.f32 %v103, %v122
    %v128 = vmul.f32 %v104, %v122
    %v129 = vmul.f32 %v105, %v122
    %v130 = vmul.f32 %v106, %v122
    %v131 = vlaneseq
    %v132 = vshrl.u32 %v131, 7
    %v133 = vsub.s32 0, %v132
    %v134 = vrot.slane %v62, %v133
    %v135 = vmul.f32 %v99, %v134
    %v136 = vmul.f32 %v100, %v134
    %v137 = vmul.f32 %v101, %v134
    %v138 = vmul.f32 %v102, %v134
    %v139 = vmul.f32 %v103, %v134
    %v140 = vmul.f32 %v104, %v134
    %v141 = vmul.f32 %v105, %v134
    %v142 = vmul.f32 %v106, %v134
    %v143 = vlaneseq
    %v144 = vshrl.u32 %v143, 7
    %v145 = vsub.s32 1, %v144
    %v146 = vrot.slane %v31, %v145
    %vm147 = vcmp.eq.s32.totalorder %v71, %v146
    %vm148 = vcmp.eq.s32.totalorder %v72, %v146
    %vm149 = vcmp.eq.s32.totalorder %v73, %v146
    %vm150 = vcmp.eq.s32.totalorder %v74, %v146
    %vm151 = vcmp.eq.s32.totalorder %v75, %v146
    %vm152 = vcmp.eq.s32.totalorder %v76, %v146
    %vm153 = vcmp.eq.s32.totalorder %v77, %v146
    %vm154 = vcmp.eq.s32.totalorder %v78, %v146
    %v155 = vsel %vm147, 1, 0
    %v156 = vsel %vm148, 1, 0
    %v157 = vsel %vm149, 1, 0
    %v158 = vsel %vm150, 1, 0
    %v159 = vsel %vm151, 1, 0
    %v160 = vsel %vm152, 1, 0
    %v161 = vsel %vm153, 1, 0
    %v162 = vsel %vm154, 1, 0
    %v163 = vcvt.s32.f32 %v155
    %v164 = vcvt.s32.f32 %v156
    %v165 = vcvt.s32.f32 %v157
    %v166 = vcvt.s32.f32 %v158
    %v167 = vcvt.s32.f32 %v159
    %v168 = vcvt.s32.f32 %v160
    %v169 = vcvt.s32.f32 %v161
    %v170 = vcvt.s32.f32 %v162
    %v171 = vlaneseq
    %v172 = vshrl.u32 %v171, 7
    %v173 = vsub.s32 1, %v172
    %v174 = vrot.slane %v32, %v173
    %v175 = vmul.f32 %v163, %v174
    %v176 = vmul.f32 %v164, %v174
    %v177 = vmul.f32 %v165, %v174
    %v178 = vmul.f32 %v166, %v174
    %v179 = vmul.f32 %v167, %v174
    %v180 = vmul.f32 %v168, %v174
    %v181 = vmul.f32 %v169, %v174
    %v182 = vmul.f32 %v170, %v174
    %v183 = vadd.f32 %v111, %v175
    %v184 = vadd.f32 %v112, %v176
    %v185 = vadd.f32 %v113, %v177
    %v186 = vadd.f32 %v114, %v178
    %v187 = vadd.f32 %v115, %v179
    %v188 = vadd.f32 %v116, %v180
    %v189 = vadd.f32 %v117, %v181
    %v190 = vadd.f32 %v118, %v182
    %v191 = vlaneseq
    %v192 = vshrl.u32 %v191, 7
    %v193 = vsub.s32 1, %v192
    %v194 = vrot.slane %v43, %v193
    %v195 = vmul.f32 %v163, %v194
    %v196 = vmul.f32 %v164, %v194
    %v197 = vmul.f32 %v165, %v194
    %v198 = vmul.f32 %v166, %v194
    %v199 = vmul.f32 %v167, %v194
    %v200 = vmul.f32 %v168, %v194
    %v201 = vmul.f32 %v169, %v194
    %v202 = vmul.f32 %v170, %v194
    %v203 = vadd.f32 %v123, %v195
    %v204 = vadd.f32 %v124, %v196
    %v205 = vadd.f32 %v125, %v197
    %v206 = vadd.f32 %v126, %v198
    %v207 = vadd.f32 %v127, %v199
    %v208 = vadd.f32 %v128, %v200
    %v209 = vadd.f32 %v129, %v201
    %v210 = vadd.f32 %v130, %v202
    %v211 = vlaneseq
    %v212 = vshrl.u32 %v211, 7
    %v213 = vsub.s32 1, %v212
    %v214 = vrot.slane %v62, %v213
    %v215 = vmul.f32 %v163, %v214
    %v216 = vmul.f32 %v164, %v214
    %v217 = vmul.f32 %v165, %v214
    %v218 = vmul.f32 %v166, %v214
    %v219 = vmul.f32 %v167, %v214
    %v220 = vmul.f32 %v168, %v214
    %v221 = vmul.f32 %v169, %v214
    %v222 = vmul.f32 %v170, %v214
    %v223 = vadd.f32 %v135, %v215
    %v224 = vadd.f32 %v136, %v216
    %v225 = vadd.f32 %v137, %v217
    %v226 = vadd.f32 %v138, %v218
    %v227 = vadd.f32 %v139, %v219
    %v228 = vadd.f32 %v140, %v220
    %v229 = vadd.f32 %v141, %v221
    %v230 = vadd.f32 %v142, %v222
    %v231 = vlaneseq
    %v232 = vshrl.u32 %v231, 7
    %v233 = vsub.s32 2, %v232
    %v234 = vrot.slane %v31, %v233
    %vm235 = vcmp.eq.s32.totalorder %v71, %v234
    %vm236 = vcmp.eq.s32.totalorder %v72, %v234
    %vm237 = vcmp.eq.s32.totalorder %v73, %v234
    %vm238 = vcmp.eq.s32.totalorder %v74, %v234
    %vm239 = vcmp.eq.s32.totalorder %v75, %v234
    %vm240 = vcmp.eq.s32.totalorder %v76, %v234
    %vm241 = vcmp.eq.s32.totalorder %v77, %v234
    %vm242 = vcmp.eq.s32.totalorder %v78, %v234
    %v243 = vsel %vm235, 1, 0
    %v244 = vsel %vm236, 1, 0
    %v245 = vsel %vm237, 1, 0
    %v246 = vsel %vm238, 1, 0
    %v247 = vsel %vm239, 1, 0
    %v248 = vsel %vm240, 1, 0
    %v249 = vsel %vm241, 1, 0
    %v250 = vsel %vm242, 1, 0
    %v251 = vcvt.s32.f32 %v243
    %v252 = vcvt.s32.f32 %v244
    %v253 = vcvt.s32.f32 %v245
    %v254 = vcvt.s32.f32 %v246
    %v255 = vcvt.s32.f32 %v247
    %v256 = vcvt.s32.f32 %v248
    %v257 = vcvt.s32.f32 %v249
    %v258 = vcvt.s32.f32 %v250
    %v259 = vlaneseq
    %v260 = vshrl.u32 %v259, 7
    %v261 = vsub.s32 2, %v260
    %v262 = vrot.slane %v32, %v261
    %v263 = vmul.f32 %v251, %v262
    %v264 = vmul.f32 %v252, %v262
    %v265 = vmul.f32 %v253, %v262
    %v266 = vmul.f32 %v254, %v262
    %v267 = vmul.f32 %v255, %v262
    %v268 = vmul.f32 %v256, %v262
    %v269 = vmul.f32 %v257, %v262
    %v270 = vmul.f32 %v258, %v262
    %v271 = vadd.f32 %v183, %v263
    %v272 = vadd.f32 %v184, %v264
    %v273 = vadd.f32 %v185, %v265
    %v274 = vadd.f32 %v186, %v266
    %v275 = vadd.f32 %v187, %v267
    %v276 = vadd.f32 %v188, %v268
    %v277 = vadd.f32 %v189, %v269
    %v278 = vadd.f32 %v190, %v270
    %v279 = vlaneseq
    %v280 = vshrl.u32 %v279, 7
    %v281 = vsub.s32 2, %v280
    %v282 = vrot.slane %v43, %v281
    %v283 = vmul.f32 %v251, %v282
    %v284 = vmul.f32 %v252, %v282
    %v285 = vmul.f32 %v253, %v282
    %v286 = vmul.f32 %v254, %v282
    %v287 = vmul.f32 %v255, %v282
    %v288 = vmul.f32 %v256, %v282
    %v289 = vmul.f32 %v257, %v282
    %v290 = vmul.f32 %v258, %v282
    %v291 = vadd.f32 %v203, %v283
    %v292 = vadd.f32 %v204, %v284
    %v293 = vadd.f32 %v205, %v285
    %v294 = vadd.f32 %v206, %v286
    %v295 = vadd.f32 %v207, %v287
    %v296 = vadd.f32 %v208, %v288
    %v297 = vadd.f32 %v209, %v289
    %v298 = vadd.f32 %v210, %v290
    %v299 = vlaneseq
    %v300 = vshrl.u32 %v299, 7
    %v301 = vsub.s32 2, %v300
    %v302 = vrot.slane %v62, %v301
    %v303 = vmul.f32 %v251, %v302
    %v304 = vmul.f32 %v252, %v302
    %v305 = vmul.f32 %v253, %v302
    %v306 = vmul.f32 %v254, %v302
    %v307 = vmul.f32 %v255, %v302
    %v308 = vmul.f32 %v256, %v302
    %v309 = vmul.f32 %v257, %v302
    %v310 = vmul.f32 %v258, %v302
    %v311 = vadd.f32 %v223, %v303
    %v312 = vadd.f32 %v224, %v304
    %v313 = vadd.f32 %v225, %v305
    %v314 = vadd.f32 %v226, %v306
    %v315 = vadd.f32 %v227, %v307
    %v316 = vadd.f32 %v228, %v308
    %v317 = vadd.f32 %v229, %v309
    %v318 = vadd.f32 %v230, %v310
    %v319 = vlaneseq
    %v320 = vshrl.u32 %v319, 7
    %v321 = vsub.s32 3, %v320
    %v322 = vrot.slane %v31, %v321
    %vm323 = vcmp.eq.s32.totalorder %v71, %v322
    %vm324 = vcmp.eq.s32.totalorder %v72, %v322
    %vm325 = vcmp.eq.s32.totalorder %v73, %v322
    %vm326 = vcmp.eq.s32.totalorder %v74, %v322
    %vm327 = vcmp.eq.s32.totalorder %v75, %v322
    %vm328 = vcmp.eq.s32.totalorder %v76, %v322
    %vm329 = vcmp.eq.s32.totalorder %v77, %v322
    %vm330 = vcmp.eq.s32.totalorder %v78, %v322
    %v331 = vsel %vm323, 1, 0
    %v332 = vsel %vm324, 1, 0
    %v333 = vsel %vm325, 1, 0
    %v334 = vsel %vm326, 1, 0
    %v335 = vsel %vm327, 1, 0
    %v336 = vsel %vm328, 1, 0
    %v337 = vsel %vm329, 1, 0
    %v338 = vsel %vm330, 1, 0
    %v339 = vcvt.s32.f32 %v331
    %v340 = vcvt.s32.f32 %v332
    %v341 = vcvt.s32.f32 %v333
    %v342 = vcvt.s32.f32 %v334
    %v343 = vcvt.s32.f32 %v335
    %v344 = vcvt.s32.f32 %v336
    %v345 = vcvt.s32.f32 %v337
    %v346 = vcvt.s32.f32 %v338
    %v347 = vlaneseq
    %v348 = vshrl.u32 %v347, 7
    %v349 = vsub.s32 3, %v348
    %v350 = vrot.slane %v32, %v349
    %v351 = vmul.f32 %v339, %v350
    %v352 = vmul.f32 %v340, %v350
    %v353 = vmul.f32 %v341, %v350
    %v354 = vmul.f32 %v342, %v350
    %v355 = vmul.f32 %v343, %v350
    %v356 = vmul.f32 %v344, %v350
    %v357 = vmul.f32 %v345, %v350
    %v358 = vmul.f32 %v346, %v350
    %v359 = vadd.f32 %v271, %v351
    %v360 = vadd.f32 %v272, %v352
    %v361 = vadd.f32 %v273, %v353
    %v362 = vadd.f32 %v274, %v354
    %v363 = vadd.f32 %v275, %v355
    %v364 = vadd.f32 %v276, %v356
    %v365 = vadd.f32 %v277, %v357
    %v366 = vadd.f32 %v278, %v358
    %v367 = vlaneseq
    %v368 = vshrl.u32 %v367, 7
    %v369 = vsub.s32 3, %v368
    %v370 = vrot.slane %v43, %v369
    %v371 = vmul.f32 %v339, %v370
    %v372 = vmul.f32 %v340, %v370
    %v373 = vmul.f32 %v341, %v370
    %v374 = vmul.f32 %v342, %v370
    %v375 = vmul.f32 %v343, %v370
    %v376 = vmul.f32 %v344, %v370
    %v377 = vmul.f32 %v345, %v370
    %v378 = vmul.f32 %v346, %v370
    %v379 = vadd.f32 %v291, %v371
    %v380 = vadd.f32 %v292, %v372
    %v381 = vadd.f32 %v293, %v373
    %v382 = vadd.f32 %v294, %v374
    %v383 = vadd.f32 %v295, %v375
    %v384 = vadd.f32 %v296, %v376
    %v385 = vadd.f32 %v297, %v377
    %v386 = vadd.f32 %v298, %v378
    %v387 = vlaneseq
    %v388 = vshrl.u32 %v387, 7
    %v389 = vsub.s32 3, %v388
    %v390 = vrot.slane %v62, %v389
    %v391 = vmul.f32 %v339, %v390
    %v392 = vmul.f32 %v340, %v390
    %v393 = vmul.f32 %v341, %v390
    %v394 = vmul.f32 %v342, %v390
    %v395 = vmul.f32 %v343, %v390
    %v396 = vmul.f32 %v344, %v390
    %v397 = vmul.f32 %v345, %v390
    %v398 = vmul.f32 %v346, %v390
    %v399 = vadd.f32 %v311, %v391
    %v400 = vadd.f32 %v312, %v392
    %v401 = vadd.f32 %v313, %v393
    %v402 = vadd.f32 %v314, %v394
    %v403 = vadd.f32 %v315, %v395
    %v404 = vadd.f32 %v316, %v396
    %v405 = vadd.f32 %v317, %v397
    %v406 = vadd.f32 %v318, %v398
    %v407 = vlaneseq
    %v408 = vshrl.u32 %v407, 7
    %v409 = vsub.s32 4, %v408
    %v410 = vrot.slane %v31, %v409
    %vm411 = vcmp.eq.s32.totalorder %v71, %v410
    %vm412 = vcmp.eq.s32.totalorder %v72, %v410
    %vm413 = vcmp.eq.s32.totalorder %v73, %v410
    %vm414 = vcmp.eq.s32.totalorder %v74, %v410
    %vm415 = vcmp.eq.s32.totalorder %v75, %v410
    %vm416 = vcmp.eq.s32.totalorder %v76, %v410
    %vm417 = vcmp.eq.s32.totalorder %v77, %v410
    %vm418 = vcmp.eq.s32.totalorder %v78, %v410
    %v419 = vsel %vm411, 1, 0
    %v420 = vsel %vm412, 1, 0
    %v421 = vsel %vm413, 1, 0
    %v422 = vsel %vm414, 1, 0
    %v423 = vsel %vm415, 1, 0
    %v424 = vsel %vm416, 1, 0
    %v425 = vsel %vm417, 1, 0
    %v426 = vsel %vm418, 1, 0
    %v427 = vcvt.s32.f32 %v419
    %v428 = vcvt.s32.f32 %v420
    %v429 = vcvt.s32.f32 %v421
    %v430 = vcvt.s32.f32 %v422
    %v431 = vcvt.s32.f32 %v423
    %v432 = vcvt.s32.f32 %v424
    %v433 = vcvt.s32.f32 %v425
    %v434 = vcvt.s32.f32 %v426
    %v435 = vlaneseq
    %v436 = vshrl.u32 %v435, 7
    %v437 = vsub.s32 4, %v436
    %v438 = vrot.slane %v32, %v437
    %v439 = vmul.f32 %v427, %v438
    %v440 = vmul.f32 %v428, %v438
    %v441 = vmul.f32 %v429, %v438
    %v442 = vmul.f32 %v430, %v438
    %v443 = vmul.f32 %v431, %v438
    %v444 = vmul.f32 %v432, %v438
    %v445 = vmul.f32 %v433, %v438
    %v446 = vmul.f32 %v434, %v438
    %v447 = vadd.f32 %v359, %v439
    %v448 = vadd.f32 %v360, %v440
    %v449 = vadd.f32 %v361, %v441
    %v450 = vadd.f32 %v362, %v442
    %v451 = vadd.f32 %v363, %v443
    %v452 = vadd.f32 %v364, %v444
    %v453 = vadd.f32 %v365, %v445
    %v454 = vadd.f32 %v366, %v446
    %v455 = vlaneseq
    %v456 = vshrl.u32 %v455, 7
    %v457 = vsub.s32 4, %v456
    %v458 = vrot.slane %v43, %v457
    %v459 = vmul.f32 %v427, %v458
    %v460 = vmul.f32 %v428, %v458
    %v461 = vmul.f32 %v429, %v458
    %v462 = vmul.f32 %v430, %v458
    %v463 = vmul.f32 %v431, %v458
    %v464 = vmul.f32 %v432, %v458
    %v465 = vmul.f32 %v433, %v458
    %v466 = vmul.f32 %v434, %v458
    %v467 = vadd.f32 %v379, %v459
    %v468 = vadd.f32 %v380, %v460
    %v469 = vadd.f32 %v381, %v461
    %v470 = vadd.f32 %v382, %v462
    %v471 = vadd.f32 %v383, %v463
    %v472 = vadd.f32 %v384, %v464
    %v473 = vadd.f32 %v385, %v465
    %v474 = vadd.f32 %v386, %v466
    %v475 = vlaneseq
    %v476 = vshrl.u32 %v475, 7
    %v477 = vsub.s32 4, %v476
    %v478 = vrot.slane %v62, %v477
    %v479 = vmul.f32 %v427, %v478
    %v480 = vmul.f32 %v428, %v478
    %v481 = vmul.f32 %v429, %v478
    %v482 = vmul.f32 %v430, %v478
    %v483 = vmul.f32 %v431, %v478
    %v484 = vmul.f32 %v432, %v478
    %v485 = vmul.f32 %v433, %v478
    %v486 = vmul.f32 %v434, %v478
    %v487 = vadd.f32 %v399, %v479
    %v488 = vadd.f32 %v400, %v480
    %v489 = vadd.f32 %v401, %v481
    %v490 = vadd.f32 %v402, %v482
    %v491 = vadd.f32 %v403, %v483
    %v492 = vadd.f32 %v404, %v484
    %v493 = vadd.f32 %v405, %v485
    %v494 = vadd.f32 %v406, %v486
    %v495 = vlaneseq
    %v496 = vshrl.u32 %v495, 7
    %v497 = vsub.s32 5, %v496
    %v498 = vrot.slane %v31, %v497
    %vm499 = vcmp.eq.s32.totalorder %v71, %v498
    %vm500 = vcmp.eq.s32.totalorder %v72, %v498
    %vm501 = vcmp.eq.s32.totalorder %v73, %v498
    %vm502 = vcmp.eq.s32.totalorder %v74, %v498
    %vm503 = vcmp.eq.s32.totalorder %v75, %v498
    %vm504 = vcmp.eq.s32.totalorder %v76, %v498
    %vm505 = vcmp.eq.s32.totalorder %v77, %v498
    %vm506 = vcmp.eq.s32.totalorder %v78, %v498
    %v507 = vsel %vm499, 1, 0
    %v508 = vsel %vm500, 1, 0
    %v509 = vsel %vm501, 1, 0
    %v510 = vsel %vm502, 1, 0
    %v511 = vsel %vm503, 1, 0
    %v512 = vsel %vm504, 1, 0
    %v513 = vsel %vm505, 1, 0
    %v514 = vsel %vm506, 1, 0
    %v515 = vcvt.s32.f32 %v507
    %v516 = vcvt.s32.f32 %v508
    %v517 = vcvt.s32.f32 %v509
    %v518 = vcvt.s32.f32 %v510
    %v519 = vcvt.s32.f32 %v511
    %v520 = vcvt.s32.f32 %v512
    %v521 = vcvt.s32.f32 %v513
    %v522 = vcvt.s32.f32 %v514
    %v523 = vlaneseq
    %v524 = vshrl.u32 %v523, 7
    %v525 = vsub.s32 5, %v524
    %v526 = vrot.slane %v32, %v525
    %v527 = vmul.f32 %v515, %v526
    %v528 = vmul.f32 %v516, %v526
    %v529 = vmul.f32 %v517, %v526
    %v530 = vmul.f32 %v518, %v526
    %v531 = vmul.f32 %v519, %v526
    %v532 = vmul.f32 %v520, %v526
    %v533 = vmul.f32 %v521, %v526
    %v534 = vmul.f32 %v522, %v526
    %v535 = vadd.f32 %v447, %v527
    %v536 = vadd.f32 %v448, %v528
    %v537 = vadd.f32 %v449, %v529
    %v538 = vadd.f32 %v450, %v530
    %v539 = vadd.f32 %v451, %v531
    %v540 = vadd.f32 %v452, %v532
    %v541 = vadd.f32 %v453, %v533
    %v542 = vadd.f32 %v454, %v534
    %v543 = vlaneseq
    %v544 = vshrl.u32 %v543, 7
    %v545 = vsub.s32 5, %v544
    %v546 = vrot.slane %v43, %v545
    %v547 = vmul.f32 %v515, %v546
    %v548 = vmul.f32 %v516, %v546
    %v549 = vmul.f32 %v517, %v546
    %v550 = vmul.f32 %v518, %v546
    %v551 = vmul.f32 %v519, %v546
    %v552 = vmul.f32 %v520, %v546
    %v553 = vmul.f32 %v521, %v546
    %v554 = vmul.f32 %v522, %v546
    %v555 = vadd.f32 %v467, %v547
    %v556 = vadd.f32 %v468, %v548
    %v557 = vadd.f32 %v469, %v549
    %v558 = vadd.f32 %v470, %v550
    %v559 = vadd.f32 %v471, %v551
    %v560 = vadd.f32 %v472, %v552
    %v561 = vadd.f32 %v473, %v553
    %v562 = vadd.f32 %v474, %v554
    %v563 = vlaneseq
    %v564 = vshrl.u32 %v563, 7
    %v565 = vsub.s32 5, %v564
    %v566 = vrot.slane %v62, %v565
    %v567 = vmul.f32 %v515, %v566
    %v568 = vmul.f32 %v516, %v566
    %v569 = vmul.f32 %v517, %v566
    %v570 = vmul.f32 %v518, %v566
    %v571 = vmul.f32 %v519, %v566
    %v572 = vmul.f32 %v520, %v566
    %v573 = vmul.f32 %v521, %v566
    %v574 = vmul.f32 %v522, %v566
    %v575 = vadd.f32 %v487, %v567
    %v576 = vadd.f32 %v488, %v568
    %v577 = vadd.f32 %v489, %v569
    %v578 = vadd.f32 %v490, %v570
    %v579 = vadd.f32 %v491, %v571
    %v580 = vadd.f32 %v492, %v572
    %v581 = vadd.f32 %v493, %v573
    %v582 = vadd.f32 %v494, %v574
    %v583 = vlaneseq
    %v584 = vshrl.u32 %v583, 7
    %v585 = vsub.s32 6, %v584
    %v586 = vrot.slane %v31, %v585
    %vm587 = vcmp.eq.s32.totalorder %v71, %v586
    %vm588 = vcmp.eq.s32.totalorder %v72, %v586
    %vm589 = vcmp.eq.s32.totalorder %v73, %v586
    %vm590 = vcmp.eq.s32.totalorder %v74, %v586
    %vm591 = vcmp.eq.s32.totalorder %v75, %v586
    %vm592 = vcmp.eq.s32.totalorder %v76, %v586
    %vm593 = vcmp.eq.s32.totalorder %v77, %v586
    %vm594 = vcmp.eq.s32.totalorder %v78, %v586
    %v595 = vsel %vm587, 1, 0
    %v596 = vsel %vm588, 1, 0
    %v597 = vsel %vm589, 1, 0
    %v598 = vsel %vm590, 1, 0
    %v599 = vsel %vm591, 1, 0
    %v600 = vsel %vm592, 1, 0
    %v601 = vsel %vm593, 1, 0
    %v602 = vsel %vm594, 1, 0
    %v603 = vcvt.s32.f32 %v595
    %v604 = vcvt.s32.f32 %v596
    %v605 = vcvt.s32.f32 %v597
    %v606 = vcvt.s32.f32 %v598
    %v607 = vcvt.s32.f32 %v599
    %v608 = vcvt.s32.f32 %v600
    %v609 = vcvt.s32.f32 %v601
    %v610 = vcvt.s32.f32 %v602
    %v611 = vlaneseq
    %v612 = vshrl.u32 %v611, 7
    %v613 = vsub.s32 6, %v612
    %v614 = vrot.slane %v32, %v613
    %v615 = vmul.f32 %v603, %v614
    %v616 = vmul.f32 %v604, %v614
    %v617 = vmul.f32 %v605, %v614
    %v618 = vmul.f32 %v606, %v614
    %v619 = vmul.f32 %v607, %v614
    %v620 = vmul.f32 %v608, %v614
    %v621 = vmul.f32 %v609, %v614
    %v622 = vmul.f32 %v610, %v614
    %v623 = vadd.f32 %v535, %v615
    %v624 = vadd.f32 %v536, %v616
    %v625 = vadd.f32 %v537, %v617
    %v626 = vadd.f32 %v538, %v618
    %v627 = vadd.f32 %v539, %v619
    %v628 = vadd.f32 %v540, %v620
    %v629 = vadd.f32 %v541, %v621
    %v630 = vadd.f32 %v542, %v622
    %v631 = vlaneseq
    %v632 = vshrl.u32 %v631, 7
    %v633 = vsub.s32 6, %v632
    %v634 = vrot.slane %v43, %v633
    %v635 = vmul.f32 %v603, %v634
    %v636 = vmul.f32 %v604, %v634
    %v637 = vmul.f32 %v605, %v634
    %v638 = vmul.f32 %v606, %v634
    %v639 = vmul.f32 %v607, %v634
    %v640 = vmul.f32 %v608, %v634
    %v641 = vmul.f32 %v609, %v634
    %v642 = vmul.f32 %v610, %v634
    %v643 = vadd.f32 %v555, %v635
    %v644 = vadd.f32 %v556, %v636
    %v645 = vadd.f32 %v557, %v637
    %v646 = vadd.f32 %v558, %v638
    %v647 = vadd.f32 %v559, %v639
    %v648 = vadd.f32 %v560, %v640
    %v649 = vadd.f32 %v561, %v641
    %v650 = vadd.f32 %v562, %v642
    %v651 = vlaneseq
    %v652 = vshrl.u32 %v651, 7
    %v653 = vsub.s32 6, %v652
    %v654 = vrot.slane %v62, %v653
    %v655 = vmul.f32 %v603, %v654
    %v656 = vmul.f32 %v604, %v654
    %v657 = vmul.f32 %v605, %v654
    %v658 = vmul.f32 %v606, %v654
    %v659 = vmul.f32 %v607, %v654
    %v660 = vmul.f32 %v608, %v654
    %v661 = vmul.f32 %v609, %v654
    %v662 = vmul.f32 %v610, %v654
    %v663 = vadd.f32 %v575, %v655
    %v664 = vadd.f32 %v576, %v656
    %v665 = vadd.f32 %v577, %v657
    %v666 = vadd.f32 %v578, %v658
    %v667 = vadd.f32 %v579, %v659
    %v668 = vadd.f32 %v580, %v660
    %v669 = vadd.f32 %v581, %v661
    %v670 = vadd.f32 %v582, %v662
    %v671 = vlaneseq
    %v672 = vshrl.u32 %v671, 7
    %v673 = vsub.s32 7, %v672
    %v674 = vrot.slane %v31, %v673
    %vm675 = vcmp.eq.s32.totalorder %v71, %v674
    %vm676 = vcmp.eq.s32.totalorder %v72, %v674
    %vm677 = vcmp.eq.s32.totalorder %v73, %v674
    %vm678 = vcmp.eq.s32.totalorder %v74, %v674
    %vm679 = vcmp.eq.s32.totalorder %v75, %v674
    %vm680 = vcmp.eq.s32.totalorder %v76, %v674
    %vm681 = vcmp.eq.s32.totalorder %v77, %v674
    %vm682 = vcmp.eq.s32.totalorder %v78, %v674
    %v683 = vsel %vm675, 1, 0
    %v684 = vsel %vm676, 1, 0
    %v685 = vsel %vm677, 1, 0
    %v686 = vsel %vm678, 1, 0
    %v687 = vsel %vm679, 1, 0
    %v688 = vsel %vm680, 1, 0
    %v689 = vsel %vm681, 1, 0
    %v690 = vsel %vm682, 1, 0
    %v691 = vcvt.s32.f32 %v683
    %v692 = vcvt.s32.f32 %v684
    %v693 = vcvt.s32.f32 %v685
    %v694 = vcvt.s32.f32 %v686
    %v695 = vcvt.s32.f32 %v687
    %v696 = vcvt.s32.f32 %v688
    %v697 = vcvt.s32.f32 %v689
    %v698 = vcvt.s32.f32 %v690
    %v699 = vlaneseq
    %v700 = vshrl.u32 %v699, 7
    %v701 = vsub.s32 7, %v700
    %v702 = vrot.slane %v32, %v701
    %v703 = vmul.f32 %v691, %v702
    %v704 = vmul.f32 %v692, %v702
    %v705 = vmul.f32 %v693, %v702
    %v706 = vmul.f32 %v694, %v702
    %v707 = vmul.f32 %v695, %v702
    %v708 = vmul.f32 %v696, %v702
    %v709 = vmul.f32 %v697, %v702
    %v710 = vmul.f32 %v698, %v702
    %v711 = vadd.f32 %v623, %v703
    %v712 = vadd.f32 %v624, %v704
    %v713 = vadd.f32 %v625, %v705
    %v714 = vadd.f32 %v626, %v706
    %v715 = vadd.f32 %v627, %v707
    %v716 = vadd.f32 %v628, %v708
    %v717 = vadd.f32 %v629, %v709
    %v718 = vadd.f32 %v630, %v710
    %v719 = vlaneseq
    %v720 = vshrl.u32 %v719, 7
    %v721 = vsub.s32 7, %v720
    %v722 = vrot.slane %v43, %v721
    %v723 = vmul.f32 %v691, %v722
    %v724 = vmul.f32 %v692, %v722
    %v725 = vmul.f32 %v693, %v722
    %v726 = vmul.f32 %v694, %v722
    %v727 = vmul.f32 %v695, %v722
    %v728 = vmul.f32 %v696, %v722
    %v729 = vmul.f32 %v697, %v722
    %v730 = vmul.f32 %v698, %v722
    %v731 = vadd.f32 %v643, %v723
    %v732 = vadd.f32 %v644, %v724
    %v733 = vadd.f32 %v645, %v725
    %v734 = vadd.f32 %v646, %v726
    %v735 = vadd.f32 %v647, %v727
    %v736 = vadd.f32 %v648, %v728
    %v737 = vadd.f32 %v649, %v729
    %v738 = vadd.f32 %v650, %v730
    %v739 = vlaneseq
    %v740 = vshrl.u32 %v739, 7
    %v741 = vsub.s32 7, %v740
    %v742 = vrot.slane %v62, %v741
    %v743 = vmul.f32 %v691, %v742
    %v744 = vmul.f32 %v692, %v742
    %v745 = vmul.f32 %v693, %v742
    %v746 = vmul.f32 %v694, %v742
    %v747 = vmul.f32 %v695, %v742
    %v748 = vmul.f32 %v696, %v742
    %v749 = vmul.f32 %v697, %v742
    %v750 = vmul.f32 %v698, %v742
    %v751 = vadd.f32 %v663, %v743
    %v752 = vadd.f32 %v664, %v744
    %v753 = vadd.f32 %v665, %v745
    %v754 = vadd.f32 %v666, %v746
    %v755 = vadd.f32 %v667, %v747
    %v756 = vadd.f32 %v668, %v748
    %v757 = vadd.f32 %v669, %v749
    %v758 = vadd.f32 %v670, %v750
    %v759 = vpack.c.bf16 %v712, %v711
    %v760 = vpack.c.bf16 %v714, %v713
    %v761 = vpack.c.bf16 %v716, %v715
    %v762 = vpack.c.bf16 %v718, %v717
    %v763 = vpack.c.bf16 %v732, %v731
    %v764 = vpack.c.bf16 %v734, %v733
    %v765 = vpack.c.bf16 %v736, %v735
    %v766 = vpack.c.bf16 %v738, %v737
    %v767 = vpack.c.bf16 %v752, %v751
    %v768 = vpack.c.bf16 %v754, %v753
    %v769 = vpack.c.bf16 %v756, %v755
    %v770 = vpack.c.bf16 %v758, %v757
    %v771 = vld [vmem:[%s4] sm:$0xff]
    %v772 = vld [vmem:[%s4 + $0x8] sm:$0xff]
    %v773 = vld [vmem:[%s4 + $0x10] sm:$0xff]
    %v774 = vld [vmem:[%s4 + $0x18] sm:$0xff]
    %v775 = vld [vmem:[%s4 + $0x20] sm:$0xff]
    %v776 = vld [vmem:[%s4 + $0x28] sm:$0xff]
    %v777 = vld [vmem:[%s4 + $0x30] sm:$0xff]
    %v778 = vld [vmem:[%s4 + $0x38] sm:$0xff]
    %v779 = vld [vmem:[%s4 + $0x40] sm:$0xff]
    %v780 = vld [vmem:[%s4 + $0x48] sm:$0xff]
    %v781 = vld [vmem:[%s4 + $0x50] sm:$0xff]
    %v782 = vld [vmem:[%s4 + $0x58] sm:$0xff]
    %v783 = vld [vmem:[%s5] sm:$0xf]
    %v784 = vld [vmem:[%s5 + $0x4] sm:$0xf]
    %v785 = vld [vmem:[%s5 + $0x8] sm:$0xf]
    %v786 = vld [vmem:[%s5 + $0xc] sm:$0xf]
    %v787 = vld [vmem:[%s5 + $0x10] sm:$0xf]
    %v788 = vld [vmem:[%s5 + $0x14] sm:$0xf]
    %v789 = vld [vmem:[%s5 + $0x18] sm:$0xf]
    %v790 = vld [vmem:[%s5 + $0x1c] sm:$0xf]
    %v791 = vld [vmem:[%s5 + $0x20] sm:$0xf]
    %v792 = vld [vmem:[%s5 + $0x24] sm:$0xf]
    %v793 = vld [vmem:[%s5 + $0x28] sm:$0xf]
    %v794 = vld [vmem:[%s5 + $0x2c] sm:$0xf]
    %v795 = vld [vmem:[%s3] sm:$0xf]
    %v796 = vld [vmem:[%s3 + $0x4] sm:$0xf]
    %v809 = vunpack.c.l.b16 %v783
    %v810 = vunpack.c.l.b16 %v784
    %v811 = vunpack.c.l.b16 %v785
    %v812 = vunpack.c.l.b16 %v786
    %v813 = vunpack.c.l.b16 %v787
    %v814 = vunpack.c.l.b16 %v788
    %v815 = vunpack.c.l.b16 %v789
    %v816 = vunpack.c.l.b16 %v790
    %v817 = vunpack.c.l.b16 %v791
    %v818 = vunpack.c.l.b16 %v792
    %v819 = vunpack.c.l.b16 %v793
    %v820 = vunpack.c.l.b16 %v794
    %v821 = vpack.c.b16 %v810, %v809
    %v822 = vpack.c.b16 %v812, %v811
    %v823 = vpack.c.b16 %v814, %v813
    %v824 = vpack.c.b16 %v816, %v815
    %v825 = vpack.c.b16 %v818, %v817
    %v826 = vpack.c.b16 %v820, %v819
    %v829 = vunpack.c.l.b16 %v795
    %v830 = vunpack.c.l.b16 %v796
    %v831 = vpack.c.b16 %v830, %v829
    %vm833 = vcmask 130048
    %v835 = vsel %vm833, %v821, 0
    %v838 = vsel %vm833, %v822, 0
    %v841 = vsel %vm833, %v823, 0
    %v844 = vsel %vm833, %v824, 0
    %v847 = vsel %vm833, %v825, 0
    %v850 = vsel %vm833, %v826, 0
    %852 = vmatprep.subr.bf16.mxu0 0
    %853 = vmatpush1.bf16.msra.mxu0 %v831
    %854 = vmatprep.subr.bf16.mxu0 0
    %855 = vmatpush1.bf16.msra.mxu0 0
    %856 = vmatprep.subr.bf16.mxu0 0
    %857 = vmatpush1.bf16.msra.mxu0 0
    %858 = vmatprep.subr.bf16.mxu0 0
    %859 = vmatpush1.bf16.msra.mxu0 0
    %860 = vmatprep.subr.bf16.mxu0 0
    %861 = vmatpush1.bf16.msra.mxu0 0
    %862 = vmatprep.subr.bf16.mxu0 0
    %863 = vmatpush1.bf16.msra.mxu0 0
    %864 = vmatprep.subr.bf16.mxu0 0
    %865 = vmatpush1.bf16.msra.mxu0 0
    %866 = vmatprep.subr.bf16.mxu0 0
    %867 = vmatpush1.bf16.msra.mxu0 0
    %868 = vmatprep.subr.bf16.mxu0 0
    %869 = vmatpush1.bf16.msra.mxu0 0
    %870 = vmatprep.subr.bf16.mxu0 0
    %871 = vmatpush1.bf16.msra.mxu0 0
    %872 = vmatprep.subr.bf16.mxu0 0
    %873 = vmatpush1.bf16.msra.mxu0 0
    %874 = vmatprep.subr.bf16.mxu0 0
    %875 = vmatpush1.bf16.msra.mxu0 0
    %876 = vmatprep.subr.bf16.mxu0 0
    %877 = vmatpush1.bf16.msra.mxu0 0
    %878 = vmatprep.subr.bf16.mxu0 0
    %879 = vmatpush1.bf16.msra.mxu0 0
    %880 = vmatprep.subr.bf16.mxu0 0
    %881 = vmatpush1.bf16.msra.mxu0 0
    %882 = vmatprep.subr.bf16.mxu0 0
    %883 = vmatpush1.bf16.msra.mxu0 0
    %884 = vmatprep.mubr.bf16.mxu0 0
    %885 = vmatmul.mubr.bf16.gmra.mrb[0].mxu0 %v835
    %v886 = vpop.f32.mrb[0].mxu0
    %v887 = vadd.f32 0.0, %v886
    %v888 = vpop.f32.mrb[0].mxu0
    %v889 = vpop.f32.mrb[0].mxu0
    %v890 = vadd.f32 0.0, %v889
    %v891 = vpop.f32.mrb[0].mxu0
    %892 = vmatprep.mubr.bf16.mxu0 0
    %893 = vmatmul.mubr.bf16.gmra.mrb[0].mxu0 %v838
    %v894 = vpop.f32.mrb[0].mxu0
    %v895 = vadd.f32 0.0, %v894
    %v896 = vpop.f32.mrb[0].mxu0
    %v897 = vpop.f32.mrb[0].mxu0
    %v898 = vadd.f32 0.0, %v897
    %v899 = vpop.f32.mrb[0].mxu0
    %900 = vmatprep.mubr.bf16.mxu0 0
    %901 = vmatmul.mubr.bf16.gmra.mrb[0].mxu0 %v841
    %v902 = vpop.f32.mrb[0].mxu0
    %v903 = vadd.f32 0.0, %v902
    %v904 = vpop.f32.mrb[0].mxu0
    %v905 = vpop.f32.mrb[0].mxu0
    %v906 = vadd.f32 0.0, %v905
    %v907 = vpop.f32.mrb[0].mxu0
    %908 = vmatprep.mubr.bf16.mxu0 0
    %909 = vmatmul.mubr.bf16.gmra.mrb[0].mxu0 %v844
    %v910 = vpop.f32.mrb[0].mxu0
    %v911 = vadd.f32 0.0, %v910
    %v912 = vpop.f32.mrb[0].mxu0
    %v913 = vpop.f32.mrb[0].mxu0
    %v914 = vadd.f32 0.0, %v913
    %v915 = vpop.f32.mrb[0].mxu0
    %916 = vmatprep.mubr.bf16.mxu0 0
    %917 = vmatmul.mubr.bf16.gmra.mrb[0].mxu0 %v847
    %v918 = vpop.f32.mrb[0].mxu0
    %v919 = vadd.f32 0.0, %v918
    %v920 = vpop.f32.mrb[0].mxu0
    %v921 = vpop.f32.mrb[0].mxu0
    %v922 = vadd.f32 0.0, %v921
    %v923 = vpop.f32.mrb[0].mxu0
    %924 = vmatprep.mubr.bf16.mxu0 0
    %925 = vmatmul.mubr.bf16.gmra.mrb[0].mxu0 %v850
    %v926 = vpop.f32.mrb[0].mxu0
    %v927 = vadd.f32 0.0, %v926
    %v928 = vpop.f32.mrb[0].mxu0
    %v929 = vpop.f32.mrb[0].mxu0
    %v930 = vadd.f32 0.0, %v929
    %v931 = vpop.f32.mrb[0].mxu0
    %932 = vdwg.mxu0
    %v945 = vunpack.c.l.b16 %v771
    %v946 = vunpack.c.h.b16 %v771
    %v947 = vunpack.c.l.b16 %v772
    %v948 = vunpack.c.h.b16 %v772
    %v949 = vunpack.c.l.b16 %v773
    %v950 = vunpack.c.h.b16 %v773
    %v951 = vunpack.c.l.b16 %v774
    %v952 = vunpack.c.h.b16 %v774
    %v953 = vunpack.c.l.b16 %v775
    %v954 = vunpack.c.h.b16 %v775
    %v955 = vunpack.c.l.b16 %v776
    %v956 = vunpack.c.h.b16 %v776
    %v957 = vunpack.c.l.b16 %v777
    %v958 = vunpack.c.h.b16 %v777
    %v959 = vunpack.c.l.b16 %v778
    %v960 = vunpack.c.h.b16 %v778
    %v961 = vunpack.c.l.b16 %v779
    %v962 = vunpack.c.h.b16 %v779
    %v963 = vunpack.c.l.b16 %v780
    %v964 = vunpack.c.h.b16 %v780
    %v965 = vunpack.c.l.b16 %v781
    %v966 = vunpack.c.h.b16 %v781
    %v967 = vunpack.c.l.b16 %v782
    %v968 = vunpack.c.h.b16 %v782
    %v969 = vpack.c.b16 %v947, %v945
    %v970 = vpack.c.b16 %v948, %v946
    %v971 = vpack.c.b16 %v951, %v949
    %v972 = vpack.c.b16 %v952, %v950
    %v973 = vpack.c.b16 %v955, %v953
    %v974 = vpack.c.b16 %v956, %v954
    %v975 = vpack.c.b16 %v959, %v957
    %v976 = vpack.c.b16 %v960, %v958
    %v977 = vpack.c.b16 %v963, %v961
    %v978 = vpack.c.b16 %v964, %v962
    %v979 = vpack.c.b16 %v967, %v965
    %v980 = vpack.c.b16 %v968, %v966
    %vm987 = vcmask 523264
    %v989 = vsel %vm987, %v970, 0
    %v992 = vsel %vm987, %v972, 0
    %v995 = vsel %vm987, %v974, 0
    %v998 = vsel %vm987, %v976, 0
    %v1001 = vsel %vm987, %v978, 0
    %v1004 = vsel %vm987, %v980, 0
    %1006 = vmatprep.subr.bf16.mxu0 0
    %1007 = vmatpush1.bf16.msra.mxu0 %v759
    %1008 = vmatprep.subr.bf16.mxu0 0
    %1009 = vmatpush1.bf16.msra.mxu0 %v760
    %1010 = vmatprep.subr.bf16.mxu0 0
    %1011 = vmatpush1.bf16.msra.mxu0 %v761
    %1012 = vmatprep.subr.bf16.mxu0 0
    %1013 = vmatpush1.bf16.msra.mxu0 %v762
    %1014 = vmatprep.subr.bf16.mxu0 0
    %1015 = vmatpush1.bf16.msra.mxu0 %v763
    %1016 = vmatprep.subr.bf16.mxu0 0
    %1017 = vmatpush1.bf16.msra.mxu0 %v764
    %1018 = vmatprep.subr.bf16.mxu0 0
    %1019 = vmatpush1.bf16.msra.mxu0 %v765
    %1020 = vmatprep.subr.bf16.mxu0 0
    %1021 = vmatpush1.bf16.msra.mxu0 %v766
    %1022 = vmatprep.subr.bf16.mxu0 0
    %1023 = vmatpush1.bf16.msra.mxu0 %v767
    %1024 = vmatprep.subr.bf16.mxu0 0
    %1025 = vmatpush1.bf16.msra.mxu0 %v768
    %1026 = vmatprep.subr.bf16.mxu0 0
    %1027 = vmatpush1.bf16.msra.mxu0 %v769
    %1028 = vmatprep.subr.bf16.mxu0 0
    %1029 = vmatpush1.bf16.msra.mxu0 %v770
    %1030 = vmatprep.subr.bf16.mxu0 0
    %1031 = vmatpush1.bf16.msra.mxu0 0
    %1032 = vmatprep.subr.bf16.mxu0 0
    %1033 = vmatpush1.bf16.msra.mxu0 0
    %1034 = vmatprep.subr.bf16.mxu0 0
    %1035 = vmatpush1.bf16.msra.mxu0 0
    %1036 = vmatprep.subr.bf16.mxu0 0
    %1037 = vmatpush1.bf16.msra.mxu0 0
    %1038 = vmatprep.mubr.bf16.mxu0 %v989
    %1039 = vmatmul.mubr.bf16.gmra.mrb[0].mxu0 %v969
    %v1040 = vpop.f32.mrb[0].mxu0
    %v1041 = vadd.f32 %v887, %v1040
    %v1042 = vpop.f32.mrb[0].mxu0
    %v1043 = vpop.f32.mrb[0].mxu0
    %v1044 = vadd.f32 %v890, %v1043
    %v1045 = vpop.f32.mrb[0].mxu0
    %1046 = vmatprep.mubr.bf16.mxu0 %v992
    %1047 = vmatmul.mubr.bf16.gmra.mrb[0].mxu0 %v971
    %v1048 = vpop.f32.mrb[0].mxu0
    %v1049 = vadd.f32 %v895, %v1048
    %v1050 = vpop.f32.mrb[0].mxu0
    %v1051 = vpop.f32.mrb[0].mxu0
    %v1052 = vadd.f32 %v898, %v1051
    %v1053 = vpop.f32.mrb[0].mxu0
    %1054 = vmatprep.mubr.bf16.mxu0 %v995
    %1055 = vmatmul.mubr.bf16.gmra.mrb[0].mxu0 %v973
    %v1056 = vpop.f32.mrb[0].mxu0
    %v1057 = vadd.f32 %v903, %v1056
    %v1058 = vpop.f32.mrb[0].mxu0
    %v1059 = vpop.f32.mrb[0].mxu0
    %v1060 = vadd.f32 %v906, %v1059
    %v1061 = vpop.f32.mrb[0].mxu0
    %1062 = vmatprep.mubr.bf16.mxu0 %v998
    %1063 = vmatmul.mubr.bf16.gmra.mrb[0].mxu0 %v975
    %v1064 = vpop.f32.mrb[0].mxu0
    %v1065 = vadd.f32 %v911, %v1064
    %v1066 = vpop.f32.mrb[0].mxu0
    %v1067 = vpop.f32.mrb[0].mxu0
    %v1068 = vadd.f32 %v914, %v1067
    %v1069 = vpop.f32.mrb[0].mxu0
    %1070 = vmatprep.mubr.bf16.mxu0 %v1001
    %1071 = vmatmul.mubr.bf16.gmra.mrb[0].mxu0 %v977
    %v1072 = vpop.f32.mrb[0].mxu0
    %v1073 = vadd.f32 %v919, %v1072
    %v1074 = vpop.f32.mrb[0].mxu0
    %v1075 = vpop.f32.mrb[0].mxu0
    %v1076 = vadd.f32 %v922, %v1075
    %v1077 = vpop.f32.mrb[0].mxu0
    %1078 = vmatprep.mubr.bf16.mxu0 %v1004
    %1079 = vmatmul.mubr.bf16.gmra.mrb[0].mxu0 %v979
    %v1080 = vpop.f32.mrb[0].mxu0
    %v1081 = vadd.f32 %v927, %v1080
    %v1082 = vpop.f32.mrb[0].mxu0
    %v1083 = vpop.f32.mrb[0].mxu0
    %v1084 = vadd.f32 %v930, %v1083
    %v1085 = vpop.f32.mrb[0].mxu0
    %1086 = vdwg.mxu0
    %v1087 = vmax.f32 %v1041, 0.0
    %v1088 = vmax.f32 %v1044, 0.0
    %v1089 = vmax.f32 %v1049, 0.0
    %v1090 = vmax.f32 %v1052, 0.0
    %v1091 = vmax.f32 %v1057, 0.0
    %v1092 = vmax.f32 %v1060, 0.0
    %v1093 = vmax.f32 %v1065, 0.0
    %v1094 = vmax.f32 %v1068, 0.0
    %v1095 = vmax.f32 %v1073, 0.0
    %v1096 = vmax.f32 %v1076, 0.0
    %v1097 = vmax.f32 %v1081, 0.0
    %v1098 = vmax.f32 %v1084, 0.0
    %v1099 = vld [vmem:[%s6] sm:$0xff]
    %v1100 = vld [vmem:[%s6 + $0x8] sm:$0x1]
    %v1101 = vld [vmem:[%s7] sm:$0xff]
    %v1102 = vld [vmem:[%s7 + $0x8] sm:$0x1]
    %1104 = vset.pattern.permute.xlu0 0
    %1105 = vperm.xlu0 %1104, %v1101
    %v1106 = vpop.permute.xlu0 %1105
    %1109 = vset.pattern.permute.xlu0 0
    %1110 = vperm.xlu0 %1109, %v1102
    %v1111 = vpop.permute.xlu0 %1110
    %vm1113 = vcmask 785408
    %v1115 = vsel %vm1113, %v1099, 0
    %v1118 = vsel %vm1113, %v1100, 0
    %1120 = vmatprep.subr.mxu0 0.0
    %1121 = vmatpush1.msra.mxu0 %v1087
    %1122 = vmatprep.subr.mxu0 0.0
    %1123 = vmatpush1.msra.mxu0 %v1088
    %1124 = vmatprep.subr.mxu0 0.0
    %1125 = vmatpush1.msra.mxu0 %v1089
    %1126 = vmatprep.subr.mxu0 0.0
    %1127 = vmatpush1.msra.mxu0 %v1090
    %1128 = vmatprep.subr.mxu0 0.0
    %1129 = vmatpush1.msra.mxu0 %v1091
    %1130 = vmatprep.subr.mxu0 0.0
    %1131 = vmatpush1.msra.mxu0 %v1092
    %1132 = vmatprep.subr.mxu0 0.0
    %1133 = vmatpush1.msra.mxu0 %v1093
    %1134 = vmatprep.subr.mxu0 0.0
    %1135 = vmatpush1.msra.mxu0 %v1094
    %1136 = vmatprep.subr.mxu0 0.0
    %1137 = vmatpush1.msra.mxu0 %v1095
    %1138 = vmatprep.subr.mxu0 0.0
    %1139 = vmatpush1.msra.mxu0 %v1096
    %1140 = vmatprep.subr.mxu0 0.0
    %1141 = vmatpush1.msra.mxu0 %v1097
    %1142 = vmatprep.subr.mxu0 0.0
    %1143 = vmatpush1.msra.mxu0 %v1098
    %1144 = vmatprep.subr.mxu0 0.0
    %1145 = vmatpush1.msra.mxu0 0.0
    %1146 = vmatprep.subr.mxu0 0.0
    %1147 = vmatpush1.msra.mxu0 0.0
    %1148 = vmatprep.subr.mxu0 0.0
    %1149 = vmatpush1.msra.mxu0 0.0
    %1150 = vmatprep.subr.mxu0 0.0
    %1151 = vmatpush1.msra.mxu0 0.0
    %1152 = vmatprep.subr.mxu0 0.0
    %1153 = vmatpush1.msra.mxu0 0.0
    %1154 = vmatprep.subr.mxu0 0.0
    %1155 = vmatpush1.msra.mxu0 0.0
    %1156 = vmatprep.subr.mxu0 0.0
    %1157 = vmatpush1.msra.mxu0 0.0
    %1158 = vmatprep.subr.mxu0 0.0
    %1159 = vmatpush1.msra.mxu0 0.0
    %1160 = vmatprep.subr.mxu0 0.0
    %1161 = vmatpush1.msra.mxu0 0.0
    %1162 = vmatprep.subr.mxu0 0.0
    %1163 = vmatpush1.msra.mxu0 0.0
    %1164 = vmatprep.subr.mxu0 0.0
    %1165 = vmatpush1.msra.mxu0 0.0
    %1166 = vmatprep.subr.mxu0 0.0
    %1167 = vmatpush1.msra.mxu0 0.0
    %1168 = vmatprep.subr.mxu0 0.0
    %1169 = vmatpush1.msra.mxu0 0.0
    %1170 = vmatprep.subr.mxu0 0.0
    %1171 = vmatpush1.msra.mxu0 0.0
    %1172 = vmatprep.subr.mxu0 0.0
    %1173 = vmatpush1.msra.mxu0 0.0
    %1174 = vmatprep.subr.mxu0 0.0
    %1175 = vmatpush1.msra.mxu0 0.0
    %1176 = vmatprep.subr.mxu0 0.0
    %1177 = vmatpush1.msra.mxu0 0.0
    %1178 = vmatprep.subr.mxu0 0.0
    %1179 = vmatpush1.msra.mxu0 0.0
    %1180 = vmatprep.subr.mxu0 0.0
    %1181 = vmatpush1.msra.mxu0 0.0
    %1182 = vmatprep.subr.mxu0 0.0
    %1183 = vmatpush1.msra.mxu0 0.0
    %1184 = vmatprep.mubr.f32.mxu0 0.0
    %1185 = vmatmul.mubr.f32.gmra.mrb[0].mxu0 %v1115
    %v1186 = vpop.f32.mrb[0].mxu0
    %v1187 = vadd.f32 %v1106, %v1186
    %v1188 = vpop.f32.mrb[0].mxu0
    %1189 = vmatprep.mubr.f32.mxu0 0.0
    %1190 = vmatmul.mubr.f32.gmra.mrb[0].mxu0 %v1118
    %v1191 = vpop.f32.mrb[0].mxu0
    %v1192 = vadd.f32 %v1111, %v1191
    %v1193 = vpop.f32.mrb[0].mxu0
    %1194 = vdwg.mxu0
    %v1195 = vxor.u32 %v1187, 2147483648
    %v1196 = vxor.u32 %v1192, 2147483648
    %v1197 = vmul.f32 %v1195, 1.442695
    %v1198 = vpow.pop %v1197
    %v1199 = vmul.f32 %v1196, 1.442695
    %v1200 = vpow.pop %v1199
    %v1201 = vadd.f32 %v1198, 1.0
    %v1202 = vadd.f32 %v1200, 1.0
    %v1203 = vrcp.pop %v1201
    %v1204 = vmul.f32 1.0, %v1203
    %v1205 = vrcp.pop %v1202
    %v1206 = vmul.f32 1.0, %v1205
    %v1207 = vsel %vm50, 1, 0
    %vm1208 = vcmp.eq.s32.totalorder %v1207, 1
    %v1210 = vrot.slane %v1204, 5
    %v1212 = vsel %vm1208, %v1204, %v1210
    %v1213 = vsel %vm69, 1, 0
    %vm1214 = vcmp.eq.s32.totalorder %v1213, 1
    %v1216 = vrot.slane %v1212, 5
    %v1218 = vsel %vm1214, %v1204, %v1216
    %v1219 = vsel %vm1214, %v1206, %v1216
    %1220 = vst [vmem:[#allocation2 - $0x6] sm:$0xc0] %v1218
    %1221 = vst [vmem:[#allocation2 + $0x2] sm:$0x1] %v1219
    // Predicated region
    $region34: #{texture_editable_neumesh_forward.1} parent=1 // pred_check
      _
    $region35: #{texture_editable_neumesh_forward.1} parent=1 // pred_check_branch
      %1223 = sbr.rel (0) target = $region37
    $region36: #{texture_editable_neumesh_forward.1} parent=1 // pred_region
      %s1225 = ssub.s32 64, 64
      %1226 = vsyncadd [#allocation3], %s1225
      %s1228 = sshll.u32 [#allocation2], 4
      %s1229 = int_to_ptr.vmem [resolvable:$true] %s1228
      %1231 = dma.vmem_to_hbm [thread:$0]  %s1229, 64, %s8, [#allocation3]
    $region37: #{texture_editable_neumesh_forward.1} parent=1 // pred_fallthru
      _
    // Predicated region
    $region38: #{texture_editable_neumesh_forward.1} parent=1 // pred_check
      _
    $region39: #{texture_editable_neumesh_forward.1} parent=1 // pred_check_branch
      %1233 = sbr.rel (0) target = $region41
    $region40: #{texture_editable_neumesh_forward.1} parent=1 // pred_region
      %1234 = dma.done [#allocation3], 64
    $region41: #{texture_editable_neumesh_forward.1} parent=1 // pred_fallthru
      _
    %1235 = vsyncpa [#allocation3], 1

</llo_original>
